<compile_context>
chip_gen: v5e
topology: v5e:2x2
jax: 0.10.0
libtpu: 0.0.40
codegen_flags: <defaults>
</compile_context>

<pallas_src>
import jax
import jax.numpy as jnp
import numpy as np
from jax.experimental import pallas as pl
from jax.experimental.pallas import tpu as pltpu

# TODO(synk): PREFIX_TO_TRAFFIC_ID / PREFIX_TO_APP_ID / AUX_ID are external dicts in the
# original repo; their lengths are fixed here to representative values.
NUM_TRAFFIC = 12
NUM_APP = 17
NUM_AUX = 2
N_HEADS = NUM_TRAFFIC + NUM_APP + NUM_AUX          # 31
HEAD_PAD = 128                                     # lane-dense head output

# Linear(247, 200) forces the temporal pipeline: 1500 -> conv1(4,3) 499 -> conv2(5,1) 495
# -> MaxPool(2,2) 247, so the input length must be 1500.
L_IN = 1500
EPS = 1e-5
C = 30                                             # conv channels
CP = 32                                            # conv channels padded to sublane multiple
LB = 256                                           # per-sample lane block (250 valid + 6 pad)
K3, N3 = 256, 256                                  # fc1 padded (K 247->256, N 200->256)
K4, N4 = 256, 128                                  # fc2 padded (K 200->256, N 100->128)
K5, N5 = 128, 128                                  # fc3 padded (K 100->128, N  50->128)


# ------------------------------- Pallas kernels --------------------------------
def fused_backbone_kernel(x_ref, w1_ref, s1_ref, t1_ref, wz_ref, s2_ref, t2_ref,
                          w3_ref, b3_ref, s3_ref, t3_ref,
                          w4_ref, b4_ref, s4_ref, t4_ref,
                          w5_ref, b5_ref, o_ref):
    # x_ref : (1, 6, BT*LB) with x[0, p, b*LB + t] = input[b, 6*t + p] (phase-split signal,
    #         batch along lanes, per-sample time padded 250 -> 256 with zeros).
    f32 = jnp.float32
    xs = x_ref[0]                                   # (6, LT)
    LT = xs.shape[1]
    BT = LT // LB

    def shift(a, k):
        # a[:, j] -> a[:, j + k]; the k tail columns become 0.  Shifted-in garbage only
        # lands in per-sample pad columns that are killed by zero K-rows of w3.
        return jnp.concatenate([a[:, k:], jnp.zeros((a.shape[0], k), f32)], axis=1)

    # ---- conv_1 (k=4, stride=3) as even / odd output streams, batch along lanes ----
    w1 = w1_ref[...]                                # (CP, 4)
    ev = (w1[:, 0:1] * xs[0:1, :] + w1[:, 1:2] * xs[1:2, :]
          + w1[:, 2:3] * xs[2:3, :] + w1[:, 3:4] * xs[3:4, :])              # (CP, LT)
    od = (w1[:, 0:1] * xs[3:4, :] + w1[:, 1:2] * xs[4:5, :]
          + w1[:, 2:3] * xs[5:6, :] + w1[:, 3:4] * shift(xs[0:1, :], 1))    # (CP, LT)
    bn1s = s1_ref[...]; bn1t = t1_ref[...]
    ev = jnp.maximum(ev * bn1s + bn1t, 0.0)
    od = jnp.maximum(od * bn1s + bn1t, 0.0)

    # ---- conv_2 (k=5) as ONE tap-stacked (CP,160)@(160,LT) matmul per pooling phase ----
    # stk rows: [ev, od, ev>>1, od>>1, ev>>2, od>>2]; the even phase uses rows 0:160,
    # the odd phase rows 32:192, both with the same tap-stacked weight.
    stk = jnp.concatenate([ev, od, shift(ev, 1), shift(od, 1),
                           shift(ev, 2), shift(od, 2)], axis=0)             # (6*CP, LT)
    wz = wz_ref[...]                                                        # (CP, 5*CP)
    ze = jnp.dot(wz, stk[0:5 * CP, :], preferred_element_type=f32)          # (CP, LT)
    zo = jnp.dot(wz, stk[CP:6 * CP, :], preferred_element_type=f32)         # (CP, LT)
    bn2s = s2_ref[...]; bn2t = t2_ref[...]
    ze = jnp.maximum(ze * bn2s + bn2t, 0.0)
    zo = jnp.maximum(zo * bn2s + bn2t, 0.0)
    pooled = jnp.maximum(ze, zo)                    # (CP, LT)  MaxPool1d(2,2); Dropout = id

    # ---- batch: lanes -> sublane blocks (256-aligned slices) for the FC stack ----
    X = jnp.concatenate([pooled[:, b * LB:(b + 1) * LB] for b in range(BT)],
                        axis=0)                                             # (BT*CP, 256)

    S3 = jnp.concatenate([s3_ref[...]] * BT, axis=0)                        # (BT*CP, 1)
    T3 = jnp.concatenate([t3_ref[...]] * BT, axis=0)
    S4 = jnp.concatenate([s4_ref[...]] * BT, axis=0)
    T4 = jnp.concatenate([t4_ref[...]] * BT, axis=0)

    H = jnp.dot(X, w3_ref[...], preferred_element_type=f32) + b3_ref[...]   # (BT*CP, 256)
    H = jnp.maximum(H * S3 + T3, 0.0)
    H = jnp.dot(H, w4_ref[...], preferred_element_type=f32) + b4_ref[...]   # (BT*CP, 128)
    H = jnp.maximum(H * S4 + T4, 0.0)
    H = jnp.dot(H, w5_ref[...], preferred_element_type=f32) + b5_ref[...]   # (BT*CP, 128)
    o_ref[...] = H                                                          # dense lane store


def heads_kernel(x_ref, w_ref, b_ref, o_ref):
    # x_ref: (HT, 1500); w_ref: (1500, 128) = [task1 | task2 | task3 | zero-pad]
    o_ref[...] = (jnp.dot(x_ref[...], w_ref[...], preferred_element_type=jnp.float32)
                  + b_ref[...])


# ------------------------------- wrapper (glue) ---------------------------------
def _fuse_bn(gamma, beta, mean, var, conv_bias=None):
    s = gamma / jnp.sqrt(var + EPS)
    t = beta - mean * s if conv_bias is None else (conv_bias - mean) * s + beta
    return s, t


def _pad_c(a, axis):
    pad = [(0, 0)] * a.ndim
    pad[axis] = (0, CP - a.shape[axis])
    return jnp.pad(a, pad)


def one_d_cnn_forward(x, P):
    B = x.shape[0]
    x0 = x[:, 0, :].astype(jnp.float32)                            # (B, 1500)

    BT = min(16, B)                                                # samples per grid step
    Bp = ((B + BT - 1) // BT) * BT
    G = Bp // BT
    if Bp != B:
        x0 = jnp.pad(x0, ((0, Bp - B), (0, 0)))

    # phase split + per-sample time pad 250 -> LB=256; batch along lanes inside a tile:
    # x6[g, p, bl*LB + t] = input[g*BT + bl, 6*t + p]
    xp = jnp.pad(x0, ((0, 0), (0, 6 * LB - L_IN)))                 # (Bp, 1536)
    x6 = xp.reshape(Bp, LB, 6).transpose(0, 2, 1)                  # (Bp, 6, 256)
    x6 = (x6.reshape(G, BT, 6, LB).transpose(0, 2, 1, 3)
            .reshape(G, 6, BT * LB))                               # (G, 6, BT*256)

    # fold BatchNorm running stats (+ conv bias) into per-channel scale / shift
    s1, t1 = _fuse_bn(P['g1'], P['be1'], P['m1'], P['v1'], P['b1'])
    s2, t2 = _fuse_bn(P['g2'], P['be2'], P['m2'], P['v2'], P['b2'])
    s3, t3 = _fuse_bn(P['g3'], P['be3'], P['m3'], P['v3'])
    s4, t4 = _fuse_bn(P['g4'], P['be4'], P['m4'], P['v4'])

    w1p = _pad_c(P['w1'][:, 0, :], 0)                              # (CP, 4)
    V = _pad_c(_pad_c(jnp.transpose(P['w2'], (2, 0, 1)), 1), 2)    # (5, CP, CP) [k,out,in]
    wz = jnp.concatenate([V[k] for k in range(5)], axis=1)         # (CP, 160) tap-stacked
    s1c = _pad_c(s1[:, None], 0); t1c = _pad_c(t1[:, None], 0)     # (CP, 1)
    s2c = _pad_c(s2[:, None], 0); t2c = _pad_c(t2[:, None], 0)
    s3c = _pad_c(s3[:, None], 0); t3c = _pad_c(t3[:, None], 0)
    s4c = _pad_c(s4[:, None], 0); t4c = _pad_c(t4[:, None], 0)

    # FC weights zero-padded so every matmul / store is (8,128)-aligned; zero K-rows also
    # kill the garbage pad columns of the activations.
    w3p = jnp.pad(P['w3'], ((0, K3 - 247), (0, N3 - 200)))
    b3p = jnp.pad(P['b3'], (0, N3 - 200))[None, :]
    w4p = jnp.pad(P['w4'], ((0, K4 - 200), (0, N4 - 100)))
    b4p = jnp.pad(P['b4'], (0, N4 - 100))[None, :]
    w5p = jnp.pad(P['w5'], ((0, K5 - 100), (0, N5 - 50)))
    b5p = jnp.pad(P['b5'], (0, N5 - 50))[None, :]

    def const(*shape):
        return pl.BlockSpec(shape, lambda i: (0,) * len(shape))

    h = pl.pallas_call(
        fused_backbone_kernel,
        out_shape=jax.ShapeDtypeStruct((Bp * CP, N5), jnp.float32),
        grid=(G,),
        in_specs=[
            pl.BlockSpec((1, 6, BT * LB), lambda i: (i, 0, 0)),    # phase-split input tile
            const(CP, 4), const(CP, 1), const(CP, 1),              # w1, s1, t1
            const(CP, 5 * CP), const(CP, 1), const(CP, 1),         # wz (tap-stacked), s2, t2
            const(K3, N3), const(1, N3), const(CP, 1), const(CP, 1),   # w3, b3, s3, t3
            const(K4, N4), const(1, N4), const(CP, 1), const(CP, 1),   # w4, b4, s4, t4
            const(K5, N5), const(1, N5),                           # w5, b5
        ],
        out_specs=pl.BlockSpec((BT * CP, N5), lambda i: (i, 0)),
        compiler_params=pltpu.CompilerParams(
            dimension_semantics=("parallel",),
            vmem_limit_bytes=32 * 1024 * 1024),
        cost_estimate=pl.CostEstimate(flops=13_000_000 * Bp, transcendentals=0,
                                      bytes_accessed=25_000 * Bp + 600_000),
    )(x6, w1p, s1c, t1c, wz, s2c, t2c,
      w3p, b3p, s3c, t3c, w4p, b4p, s4c, t4c, w5p, b5p)            # (Bp*CP, 128)

    # drop pad channels / pad columns; Flatten is then a free reshape
    flat = h.reshape(Bp, CP, N5)[:B, :C, :50].reshape(B, C * 50)   # (B, 1500)

    # ---- three task heads as ONE lane-dense matmul ----
    wh = jnp.concatenate([P['wh1'], P['wh2'], P['wh3']], axis=1)   # (1500, 31)
    wh = jnp.pad(wh, ((0, 0), (0, HEAD_PAD - N_HEADS)))            # (1500, 128)
    bh = jnp.pad(jnp.concatenate([P['bh1'], P['bh2'], P['bh3']]),
                 (0, HEAD_PAD - N_HEADS))

    HT = min(256, ((B + 7) // 8) * 8)                              # rows per grid step
    Bh = ((B + HT - 1) // HT) * HT
    flat_p = jnp.pad(flat, ((0, Bh - B), (0, 0)))

    logits = pl.pallas_call(
        heads_kernel,
        out_shape=jax.ShapeDtypeStruct((Bh, HEAD_PAD), jnp.float32),
        grid=(Bh // HT,),
        in_specs=[
            pl.BlockSpec((HT, C * 50), lambda i: (i, 0)),
            pl.BlockSpec((C * 50, HEAD_PAD), lambda i: (0, 0)),
            pl.BlockSpec((1, HEAD_PAD), lambda i: (0, 0)),
        ],
        out_specs=pl.BlockSpec((HT, HEAD_PAD), lambda i: (i, 0)),
        compiler_params=pltpu.CompilerParams(dimension_semantics=("parallel",)),
    )(flat_p, wh, bh[None, :])

    o1 = logits[:B, :NUM_TRAFFIC]
    o2 = logits[:B, NUM_TRAFFIC:NUM_TRAFFIC + NUM_APP]
    o3 = logits[:B, NUM_TRAFFIC + NUM_APP:N_HEADS]
    return o1, o2, o3


# ------------------------------ pure-JAX reference -------------------------------
def reference_forward(x, P):
    hp = jax.lax.Precision.HIGHEST
    dn = ('NCH', 'OIH', 'NCH')
    B = x.shape[0]

    def bn_c(z, g, be, m, v):   # BatchNorm1d over channel dim of (B, C, F)
        return (z - m[None, :, None]) / jnp.sqrt(v[None, :, None] + EPS) * g[None, :, None] \
            + be[None, :, None]

    y = jax.lax.conv_general_dilated(x, P['w1'], (3,), 'VALID',
                                     dimension_numbers=dn, precision=hp) + P['b1'][None, :, None]
    y = jnp.maximum(bn_c(y, P['g1'], P['be1'], P['m1'], P['v1']), 0.0)
    y = jax.lax.conv_general_dilated(y, P['w2'], (1,), 'VALID',
                                     dimension_numbers=dn, precision=hp) + P['b2'][None, :, None]
    y = jnp.maximum(bn_c(y, P['g2'], P['be2'], P['m2'], P['v2']), 0.0)
    y = y[:, :, :494].reshape(B, 30, 247, 2).max(axis=-1)              # MaxPool1d(2, 2)

    h = jnp.einsum('bcf,fo->bco', y, P['w3'], precision=hp) + P['b3'][None, None, :]
    h = jnp.maximum(bn_c(h, P['g3'], P['be3'], P['m3'], P['v3']), 0.0)
    h = jnp.einsum('bcf,fo->bco', h, P['w4'], precision=hp) + P['b4'][None, None, :]
    h = jnp.maximum(bn_c(h, P['g4'], P['be4'], P['m4'], P['v4']), 0.0)
    h = jnp.einsum('bcf,fo->bco', h, P['w5'], precision=hp) + P['b5'][None, None, :]
    flat = h.reshape(B, 30 * 50)
    o1 = jnp.dot(flat, P['wh1'], precision=hp) + P['bh1'][None, :]
    o2 = jnp.dot(flat, P['wh2'], precision=hp) + P['bh2'][None, :]
    o3 = jnp.dot(flat, P['wh3'], precision=hp) + P['bh3'][None, :]
    return o1, o2, o3


# --------------------------------------- main ------------------------------------
if __name__ == "__main__":
    keys = iter(jax.random.split(jax.random.PRNGKey(0), 48))

    def nrm(shape, scale):
        return (scale * jax.random.normal(next(keys), shape)).astype(jnp.float32)

    def bn_init(c):
        return (1.0 + nrm((c,), 0.1),                                   # gamma
                nrm((c,), 0.1),                                         # beta
                nrm((c,), 0.1),                                         # running_mean
                1.0 + 0.5 * jax.random.uniform(next(keys), (c,), jnp.float32))  # running_var

    P = {}
    P['w1'], P['b1'] = nrm((30, 1, 4), (2.0 / 4) ** 0.5), nrm((30,), 0.01)
    P['g1'], P['be1'], P['m1'], P['v1'] = bn_init(30)
    P['w2'], P['b2'] = nrm((30, 30, 5), (2.0 / 150) ** 0.5), nrm((30,), 0.01)
    P['g2'], P['be2'], P['m2'], P['v2'] = bn_init(30)
    P['w3'], P['b3'] = nrm((247, 200), (2.0 / 247) ** 0.5), nrm((200,), 0.01)
    P['g3'], P['be3'], P['m3'], P['v3'] = bn_init(30)
    P['w4'], P['b4'] = nrm((200, 100), (2.0 / 200) ** 0.5), nrm((100,), 0.01)
    P['g4'], P['be4'], P['m4'], P['v4'] = bn_init(30)
    P['w5'], P['b5'] = nrm((100, 50), (2.0 / 100) ** 0.5), nrm((50,), 0.01)
    P['wh1'], P['bh1'] = nrm((1500, NUM_TRAFFIC), (1.0 / 1500) ** 0.5), nrm((NUM_TRAFFIC,), 0.01)
    P['wh2'], P['bh2'] = nrm((1500, NUM_APP), (1.0 / 1500) ** 0.5), nrm((NUM_APP,), 0.01)
    P['wh3'], P['bh3'] = nrm((1500, NUM_AUX), (1.0 / 1500) ** 0.5), nrm((NUM_AUX,), 0.01)

    B = 2
    x = jax.random.normal(next(keys), (B, 1, L_IN), jnp.float32)

    outs = jax.jit(one_d_cnn_forward)(x, P)
    outs = jax.block_until_ready(outs)

    refs = reference_forward(x, P)
    for o, r in zip(outs, refs):
        np.testing.assert_allclose(np.asarray(o), np.asarray(r), rtol=2e-2, atol=2e-2)

    print("KERNEL_OK")
</pallas_src>

<mosaic_0001>
module attributes {stable_mosaic.version = 11 : i64} {
  func.func @fused_backbone_kernel(%arg0: i32, %arg1: memref<1x6x512xf32, #tpu.memory_space<vmem>>, %arg2: memref<32x4xf32, #tpu.memory_space<vmem>>, %arg3: memref<32x1xf32, #tpu.memory_space<vmem>>, %arg4: memref<32x1xf32, #tpu.memory_space<vmem>>, %arg5: memref<32x160xf32, #tpu.memory_space<vmem>>, %arg6: memref<32x1xf32, #tpu.memory_space<vmem>>, %arg7: memref<32x1xf32, #tpu.memory_space<vmem>>, %arg8: memref<256x256xf32, #tpu.memory_space<vmem>>, %arg9: memref<1x256xf32, #tpu.memory_space<vmem>>, %arg10: memref<32x1xf32, #tpu.memory_space<vmem>>, %arg11: memref<32x1xf32, #tpu.memory_space<vmem>>, %arg12: memref<256x128xf32, #tpu.memory_space<vmem>>, %arg13: memref<1x128xf32, #tpu.memory_space<vmem>>, %arg14: memref<32x1xf32, #tpu.memory_space<vmem>>, %arg15: memref<32x1xf32, #tpu.memory_space<vmem>>, %arg16: memref<128x128xf32, #tpu.memory_space<vmem>>, %arg17: memref<1x128xf32, #tpu.memory_space<vmem>>, %arg18: memref<64x128xf32, #tpu.memory_space<vmem>>) attributes {dimension_semantics = [#tpu.dimension_semantics<parallel>], iteration_bounds = array<i64: 1>, scalar_prefetch = 0 : i64, scratch_operands = 0 : i64, tpu.core_type = #tpu.core_type<tc>, window_params = [{transform_indices = @transform_0, window_bounds = array<i64: 1, 6, 512>}, {pipeline_mode = #tpu.pipeline_mode<synchronous>, transform_indices = @transform_1, window_bounds = array<i64: 32, 4>}, {pipeline_mode = #tpu.pipeline_mode<synchronous>, transform_indices = @transform_2, window_bounds = array<i64: 32, 1>}, {pipeline_mode = #tpu.pipeline_mode<synchronous>, transform_indices = @transform_3, window_bounds = array<i64: 32, 1>}, {pipeline_mode = #tpu.pipeline_mode<synchronous>, transform_indices = @transform_4, window_bounds = array<i64: 32, 160>}, {pipeline_mode = #tpu.pipeline_mode<synchronous>, transform_indices = @transform_5, window_bounds = array<i64: 32, 1>}, {pipeline_mode = #tpu.pipeline_mode<synchronous>, transform_indices = @transform_6, window_bounds = array<i64: 32, 1>}, {pipeline_mode = #tpu.pipeline_mode<synchronous>, transform_indices = @transform_7, window_bounds = array<i64: 256, 256>}, {pipeline_mode = #tpu.pipeline_mode<synchronous>, transform_indices = @transform_8, window_bounds = array<i64: 1, 256>}, {pipeline_mode = #tpu.pipeline_mode<synchronous>, transform_indices = @transform_9, window_bounds = array<i64: 32, 1>}, {pipeline_mode = #tpu.pipeline_mode<synchronous>, transform_indices = @transform_10, window_bounds = array<i64: 32, 1>}, {pipeline_mode = #tpu.pipeline_mode<synchronous>, transform_indices = @transform_11, window_bounds = array<i64: 256, 128>}, {pipeline_mode = #tpu.pipeline_mode<synchronous>, transform_indices = @transform_12, window_bounds = array<i64: 1, 128>}, {pipeline_mode = #tpu.pipeline_mode<synchronous>, transform_indices = @transform_13, window_bounds = array<i64: 32, 1>}, {pipeline_mode = #tpu.pipeline_mode<synchronous>, transform_indices = @transform_14, window_bounds = array<i64: 32, 1>}, {pipeline_mode = #tpu.pipeline_mode<synchronous>, transform_indices = @transform_15, window_bounds = array<i64: 128, 128>}, {pipeline_mode = #tpu.pipeline_mode<synchronous>, transform_indices = @transform_16, window_bounds = array<i64: 1, 128>}, {transform_indices = @transform_17, window_bounds = array<i64: 64, 128>}]} {
    %c0 = arith.constant 0 : index
    %c0_0 = arith.constant 0 : index
    %c0_1 = arith.constant 0 : index
    %0 = vector.load %arg1[%c0, %c0_0, %c0_1] : memref<1x6x512xf32, #tpu.memory_space<vmem>>, vector<1x6x512xf32>
    %1 = vector.shape_cast %0 : vector<1x6x512xf32> to vector<6x512xf32>
    %c0_2 = arith.constant 0 : index
    %c0_3 = arith.constant 0 : index
    %2 = vector.load %arg2[%c0_2, %c0_3] : memref<32x4xf32, #tpu.memory_space<vmem>>, vector<32x4xf32>
    %3 = vector.extract_strided_slice %2 {offsets = [0, 0], sizes = [32, 1], strides = [1, 1]} : vector<32x4xf32> to vector<32x1xf32>
    %4 = vector.extract_strided_slice %1 {offsets = [0, 0], sizes = [1, 512], strides = [1, 1]} : vector<6x512xf32> to vector<1x512xf32>
    %5 = vector.broadcast %3 : vector<32x1xf32> to vector<32x512xf32>
    %6 = vector.broadcast %4 : vector<1x512xf32> to vector<32x512xf32>
    %7 = arith.mulf %5, %6 : vector<32x512xf32>
    %8 = vector.extract_strided_slice %2 {offsets = [0, 1], sizes = [32, 1], strides = [1, 1]} : vector<32x4xf32> to vector<32x1xf32>
    %9 = vector.extract_strided_slice %1 {offsets = [1, 0], sizes = [1, 512], strides = [1, 1]} : vector<6x512xf32> to vector<1x512xf32>
    %10 = vector.broadcast %8 : vector<32x1xf32> to vector<32x512xf32>
    %11 = vector.broadcast %9 : vector<1x512xf32> to vector<32x512xf32>
    %12 = arith.mulf %10, %11 : vector<32x512xf32>
    %13 = arith.addf %7, %12 : vector<32x512xf32>
    %14 = vector.extract_strided_slice %2 {offsets = [0, 2], sizes = [32, 1], strides = [1, 1]} : vector<32x4xf32> to vector<32x1xf32>
    %15 = vector.extract_strided_slice %1 {offsets = [2, 0], sizes = [1, 512], strides = [1, 1]} : vector<6x512xf32> to vector<1x512xf32>
    %16 = vector.broadcast %14 : vector<32x1xf32> to vector<32x512xf32>
    %17 = vector.broadcast %15 : vector<1x512xf32> to vector<32x512xf32>
    %18 = arith.mulf %16, %17 : vector<32x512xf32>
    %19 = arith.addf %13, %18 : vector<32x512xf32>
    %20 = vector.extract_strided_slice %2 {offsets = [0, 3], sizes = [32, 1], strides = [1, 1]} : vector<32x4xf32> to vector<32x1xf32>
    %21 = vector.extract_strided_slice %1 {offsets = [3, 0], sizes = [1, 512], strides = [1, 1]} : vector<6x512xf32> to vector<1x512xf32>
    %22 = vector.broadcast %20 : vector<32x1xf32> to vector<32x512xf32>
    %23 = vector.broadcast %21 : vector<1x512xf32> to vector<32x512xf32>
    %24 = arith.mulf %22, %23 : vector<32x512xf32>
    %25 = arith.addf %19, %24 : vector<32x512xf32>
    %26 = vector.extract_strided_slice %2 {offsets = [0, 0], sizes = [32, 1], strides = [1, 1]} : vector<32x4xf32> to vector<32x1xf32>
    %27 = vector.extract_strided_slice %1 {offsets = [3, 0], sizes = [1, 512], strides = [1, 1]} : vector<6x512xf32> to vector<1x512xf32>
    %28 = vector.broadcast %26 : vector<32x1xf32> to vector<32x512xf32>
    %29 = vector.broadcast %27 : vector<1x512xf32> to vector<32x512xf32>
    %30 = arith.mulf %28, %29 : vector<32x512xf32>
    %31 = vector.extract_strided_slice %2 {offsets = [0, 1], sizes = [32, 1], strides = [1, 1]} : vector<32x4xf32> to vector<32x1xf32>
    %32 = vector.extract_strided_slice %1 {offsets = [4, 0], sizes = [1, 512], strides = [1, 1]} : vector<6x512xf32> to vector<1x512xf32>
    %33 = vector.broadcast %31 : vector<32x1xf32> to vector<32x512xf32>
    %34 = vector.broadcast %32 : vector<1x512xf32> to vector<32x512xf32>
    %35 = arith.mulf %33, %34 : vector<32x512xf32>
    %36 = arith.addf %30, %35 : vector<32x512xf32>
    %37 = vector.extract_strided_slice %2 {offsets = [0, 2], sizes = [32, 1], strides = [1, 1]} : vector<32x4xf32> to vector<32x1xf32>
    %38 = vector.extract_strided_slice %1 {offsets = [5, 0], sizes = [1, 512], strides = [1, 1]} : vector<6x512xf32> to vector<1x512xf32>
    %39 = vector.broadcast %37 : vector<32x1xf32> to vector<32x512xf32>
    %40 = vector.broadcast %38 : vector<1x512xf32> to vector<32x512xf32>
    %41 = arith.mulf %39, %40 : vector<32x512xf32>
    %42 = arith.addf %36, %41 : vector<32x512xf32>
    %43 = vector.extract_strided_slice %2 {offsets = [0, 3], sizes = [32, 1], strides = [1, 1]} : vector<32x4xf32> to vector<32x1xf32>
    %44 = vector.extract_strided_slice %1 {offsets = [0, 0], sizes = [1, 512], strides = [1, 1]} : vector<6x512xf32> to vector<1x512xf32>
    %45 = vector.extract_strided_slice %44 {offsets = [0, 1], sizes = [1, 511], strides = [1, 1]} : vector<1x512xf32> to vector<1x511xf32>
    %cst = arith.constant 0.000000e+00 : f32
    %46 = vector.broadcast %cst : f32 to vector<1x1xf32>
    %47 = tpu.concatenate %45, %46 in 1 : vector<1x511xf32>, vector<1x1xf32> -> vector<1x512xf32>
    %48 = vector.broadcast %43 : vector<32x1xf32> to vector<32x512xf32>
    %49 = vector.broadcast %47 : vector<1x512xf32> to vector<32x512xf32>
    %50 = arith.mulf %48, %49 : vector<32x512xf32>
    %51 = arith.addf %42, %50 : vector<32x512xf32>
    %c0_4 = arith.constant 0 : index
    %c0_5 = arith.constant 0 : index
    %52 = vector.load %arg3[%c0_4, %c0_5] : memref<32x1xf32, #tpu.memory_space<vmem>>, vector<32x1xf32>
    %c0_6 = arith.constant 0 : index
    %c0_7 = arith.constant 0 : index
    %53 = vector.load %arg4[%c0_6, %c0_7] : memref<32x1xf32, #tpu.memory_space<vmem>>, vector<32x1xf32>
    %54 = vector.broadcast %52 : vector<32x1xf32> to vector<32x512xf32>
    %55 = arith.mulf %25, %54 : vector<32x512xf32>
    %56 = vector.broadcast %53 : vector<32x1xf32> to vector<32x512xf32>
    %57 = arith.addf %55, %56 : vector<32x512xf32>
    %cst_8 = arith.constant 0.000000e+00 : f32
    %58 = vector.broadcast %cst_8 : f32 to vector<32x512xf32>
    %59 = arith.maximumf %57, %58 : vector<32x512xf32>
    %60 = vector.broadcast %52 : vector<32x1xf32> to vector<32x512xf32>
    %61 = arith.mulf %51, %60 : vector<32x512xf32>
    %62 = vector.broadcast %53 : vector<32x1xf32> to vector<32x512xf32>
    %63 = arith.addf %61, %62 : vector<32x512xf32>
    %cst_9 = arith.constant 0.000000e+00 : f32
    %64 = vector.broadcast %cst_9 : f32 to vector<32x512xf32>
    %65 = arith.maximumf %63, %64 : vector<32x512xf32>
    %66 = vector.extract_strided_slice %59 {offsets = [0, 1], sizes = [32, 511], strides = [1, 1]} : vector<32x512xf32> to vector<32x511xf32>
    %cst_10 = arith.constant 0.000000e+00 : f32
    %67 = vector.broadcast %cst_10 : f32 to vector<32x1xf32>
    %68 = tpu.concatenate %66, %67 in 1 : vector<32x511xf32>, vector<32x1xf32> -> vector<32x512xf32>
    %69 = vector.extract_strided_slice %65 {offsets = [0, 1], sizes = [32, 511], strides = [1, 1]} : vector<32x512xf32> to vector<32x511xf32>
    %cst_11 = arith.constant 0.000000e+00 : f32
    %70 = vector.broadcast %cst_11 : f32 to vector<32x1xf32>
    %71 = tpu.concatenate %69, %70 in 1 : vector<32x511xf32>, vector<32x1xf32> -> vector<32x512xf32>
    %72 = vector.extract_strided_slice %59 {offsets = [0, 2], sizes = [32, 510], strides = [1, 1]} : vector<32x512xf32> to vector<32x510xf32>
    %cst_12 = arith.constant 0.000000e+00 : f32
    %73 = vector.broadcast %cst_12 : f32 to vector<32x2xf32>
    %74 = tpu.concatenate %72, %73 in 1 : vector<32x510xf32>, vector<32x2xf32> -> vector<32x512xf32>
    %75 = vector.extract_strided_slice %65 {offsets = [0, 2], sizes = [32, 510], strides = [1, 1]} : vector<32x512xf32> to vector<32x510xf32>
    %cst_13 = arith.constant 0.000000e+00 : f32
    %76 = vector.broadcast %cst_13 : f32 to vector<32x2xf32>
    %77 = tpu.concatenate %75, %76 in 1 : vector<32x510xf32>, vector<32x2xf32> -> vector<32x512xf32>
    %78 = tpu.concatenate %59, %65, %68, %71, %74, %77 in 0 : vector<32x512xf32>, vector<32x512xf32>, vector<32x512xf32>, vector<32x512xf32>, vector<32x512xf32>, vector<32x512xf32> -> vector<192x512xf32>
    %c0_14 = arith.constant 0 : index
    %c0_15 = arith.constant 0 : index
    %79 = vector.load %arg5[%c0_14, %c0_15] : memref<32x160xf32, #tpu.memory_space<vmem>>, vector<32x160xf32>
    %80 = vector.extract_strided_slice %78 {offsets = [0, 0], sizes = [160, 512], strides = [1, 1]} : vector<192x512xf32> to vector<160x512xf32>
    %cst_16 = arith.constant dense<0.000000e+00> : vector<32x512xf32>
    %81 = tpu.matmul %79, %80, %cst_16 {dimension_numbers = #tpu.dot_dimension_numbers<[1], [0], [0], [1], [0, 0, 1, 1], [], []>} : vector<32x160xf32>, vector<160x512xf32>, vector<32x512xf32> -> vector<32x512xf32>
    %82 = vector.extract_strided_slice %78 {offsets = [32, 0], sizes = [160, 512], strides = [1, 1]} : vector<192x512xf32> to vector<160x512xf32>
    %cst_17 = arith.constant dense<0.000000e+00> : vector<32x512xf32>
    %83 = tpu.matmul %79, %82, %cst_17 {dimension_numbers = #tpu.dot_dimension_numbers<[1], [0], [0], [1], [0, 0, 1, 1], [], []>} : vector<32x160xf32>, vector<160x512xf32>, vector<32x512xf32> -> vector<32x512xf32>
    %c0_18 = arith.constant 0 : index
    %c0_19 = arith.constant 0 : index
    %84 = vector.load %arg6[%c0_18, %c0_19] : memref<32x1xf32, #tpu.memory_space<vmem>>, vector<32x1xf32>
    %c0_20 = arith.constant 0 : index
    %c0_21 = arith.constant 0 : index
    %85 = vector.load %arg7[%c0_20, %c0_21] : memref<32x1xf32, #tpu.memory_space<vmem>>, vector<32x1xf32>
    %86 = vector.broadcast %84 : vector<32x1xf32> to vector<32x512xf32>
    %87 = arith.mulf %81, %86 : vector<32x512xf32>
    %88 = vector.broadcast %85 : vector<32x1xf32> to vector<32x512xf32>
    %89 = arith.addf %87, %88 : vector<32x512xf32>
    %cst_22 = arith.constant 0.000000e+00 : f32
    %90 = vector.broadcast %cst_22 : f32 to vector<32x512xf32>
    %91 = arith.maximumf %89, %90 : vector<32x512xf32>
    %92 = vector.broadcast %84 : vector<32x1xf32> to vector<32x512xf32>
    %93 = arith.mulf %83, %92 : vector<32x512xf32>
    %94 = vector.broadcast %85 : vector<32x1xf32> to vector<32x512xf32>
    %95 = arith.addf %93, %94 : vector<32x512xf32>
    %cst_23 = arith.constant 0.000000e+00 : f32
    %96 = vector.broadcast %cst_23 : f32 to vector<32x512xf32>
    %97 = arith.maximumf %95, %96 : vector<32x512xf32>
    %98 = arith.maximumf %91, %97 : vector<32x512xf32>
    %99 = vector.extract_strided_slice %98 {offsets = [0, 0], sizes = [32, 256], strides = [1, 1]} : vector<32x512xf32> to vector<32x256xf32>
    %100 = vector.extract_strided_slice %98 {offsets = [0, 256], sizes = [32, 256], strides = [1, 1]} : vector<32x512xf32> to vector<32x256xf32>
    %101 = tpu.concatenate %99, %100 in 0 : vector<32x256xf32>, vector<32x256xf32> -> vector<64x256xf32>
    %c0_24 = arith.constant 0 : index
    %c0_25 = arith.constant 0 : index
    %102 = vector.load %arg10[%c0_24, %c0_25] : memref<32x1xf32, #tpu.memory_space<vmem>>, vector<32x1xf32>
    %103 = tpu.concatenate %102, %102 in 0 : vector<32x1xf32>, vector<32x1xf32> -> vector<64x1xf32>
    %c0_26 = arith.constant 0 : index
    %c0_27 = arith.constant 0 : index
    %104 = vector.load %arg11[%c0_26, %c0_27] : memref<32x1xf32, #tpu.memory_space<vmem>>, vector<32x1xf32>
    %105 = tpu.concatenate %104, %104 in 0 : vector<32x1xf32>, vector<32x1xf32> -> vector<64x1xf32>
    %c0_28 = arith.constant 0 : index
    %c0_29 = arith.constant 0 : index
    %106 = vector.load %arg14[%c0_28, %c0_29] : memref<32x1xf32, #tpu.memory_space<vmem>>, vector<32x1xf32>
    %107 = tpu.concatenate %106, %106 in 0 : vector<32x1xf32>, vector<32x1xf32> -> vector<64x1xf32>
    %c0_30 = arith.constant 0 : index
    %c0_31 = arith.constant 0 : index
    %108 = vector.load %arg15[%c0_30, %c0_31] : memref<32x1xf32, #tpu.memory_space<vmem>>, vector<32x1xf32>
    %109 = tpu.concatenate %108, %108 in 0 : vector<32x1xf32>, vector<32x1xf32> -> vector<64x1xf32>
    %c0_32 = arith.constant 0 : index
    %c0_33 = arith.constant 0 : index
    %110 = vector.load %arg8[%c0_32, %c0_33] : memref<256x256xf32, #tpu.memory_space<vmem>>, vector<256x256xf32>
    %cst_34 = arith.constant dense<0.000000e+00> : vector<64x256xf32>
    %111 = tpu.matmul %101, %110, %cst_34 {dimension_numbers = #tpu.dot_dimension_numbers<[1], [0], [0], [1], [0, 0, 1, 1], [], []>} : vector<64x256xf32>, vector<256x256xf32>, vector<64x256xf32> -> vector<64x256xf32>
    %c0_35 = arith.constant 0 : index
    %c0_36 = arith.constant 0 : index
    %112 = vector.load %arg9[%c0_35, %c0_36] : memref<1x256xf32, #tpu.memory_space<vmem>>, vector<1x256xf32>
    %113 = vector.broadcast %112 : vector<1x256xf32> to vector<64x256xf32>
    %114 = arith.addf %111, %113 : vector<64x256xf32>
    %115 = vector.broadcast %103 : vector<64x1xf32> to vector<64x256xf32>
    %116 = arith.mulf %114, %115 : vector<64x256xf32>
    %117 = vector.broadcast %105 : vector<64x1xf32> to vector<64x256xf32>
    %118 = arith.addf %116, %117 : vector<64x256xf32>
    %cst_37 = arith.constant 0.000000e+00 : f32
    %119 = vector.broadcast %cst_37 : f32 to vector<64x256xf32>
    %120 = arith.maximumf %118, %119 : vector<64x256xf32>
    %c0_38 = arith.constant 0 : index
    %c0_39 = arith.constant 0 : index
    %121 = vector.load %arg12[%c0_38, %c0_39] : memref<256x128xf32, #tpu.memory_space<vmem>>, vector<256x128xf32>
    %cst_40 = arith.constant dense<0.000000e+00> : vector<64x128xf32>
    %122 = tpu.matmul %120, %121, %cst_40 {dimension_numbers = #tpu.dot_dimension_numbers<[1], [0], [0], [1], [0, 0, 1, 1], [], []>} : vector<64x256xf32>, vector<256x128xf32>, vector<64x128xf32> -> vector<64x128xf32>
    %c0_41 = arith.constant 0 : index
    %c0_42 = arith.constant 0 : index
    %123 = vector.load %arg13[%c0_41, %c0_42] : memref<1x128xf32, #tpu.memory_space<vmem>>, vector<1x128xf32>
    %124 = vector.broadcast %123 : vector<1x128xf32> to vector<64x128xf32>
    %125 = arith.addf %122, %124 : vector<64x128xf32>
    %126 = vector.broadcast %107 : vector<64x1xf32> to vector<64x128xf32>
    %127 = arith.mulf %125, %126 : vector<64x128xf32>
    %128 = vector.broadcast %109 : vector<64x1xf32> to vector<64x128xf32>
    %129 = arith.addf %127, %128 : vector<64x128xf32>
    %cst_43 = arith.constant 0.000000e+00 : f32
    %130 = vector.broadcast %cst_43 : f32 to vector<64x128xf32>
    %131 = arith.maximumf %129, %130 : vector<64x128xf32>
    %c0_44 = arith.constant 0 : index
    %c0_45 = arith.constant 0 : index
    %132 = vector.load %arg16[%c0_44, %c0_45] : memref<128x128xf32, #tpu.memory_space<vmem>>, vector<128x128xf32>
    %cst_46 = arith.constant dense<0.000000e+00> : vector<64x128xf32>
    %133 = tpu.matmul %131, %132, %cst_46 {dimension_numbers = #tpu.dot_dimension_numbers<[1], [0], [0], [1], [0, 0, 1, 1], [], []>} : vector<64x128xf32>, vector<128x128xf32>, vector<64x128xf32> -> vector<64x128xf32>
    %c0_47 = arith.constant 0 : index
    %c0_48 = arith.constant 0 : index
    %134 = vector.load %arg17[%c0_47, %c0_48] : memref<1x128xf32, #tpu.memory_space<vmem>>, vector<1x128xf32>
    %135 = vector.broadcast %134 : vector<1x128xf32> to vector<64x128xf32>
    %136 = arith.addf %133, %135 : vector<64x128xf32>
    %c0_49 = arith.constant 0 : index
    %c0_50 = arith.constant 0 : index
    %137 = vector.load %arg18[%c0_49, %c0_50] : memref<64x128xf32, #tpu.memory_space<vmem>>, vector<64x128xf32>
    tpu.vector_store %arg18[%c0_49, %c0_50], %136 {strides = array<i32>} : memref<64x128xf32, #tpu.memory_space<vmem>>, vector<64x128xf32>,
    return
  }
  func.func @transform_0(%arg0: i32) -> (i32, i32, i32) {
    %c0_i32 = arith.constant 0 : i32
    %c0_i32_0 = arith.constant 0 : i32
    %c0_i32_1 = arith.constant 0 : i32
    return %arg0, %c0_i32, %c0_i32_0 : i32, i32, i32
  }
  func.func @transform_1(%arg0: i32) -> (i32, i32) {
    %c0_i32 = arith.constant 0 : i32
    %c0_i32_0 = arith.constant 0 : i32
    %c0_i32_1 = arith.constant 0 : i32
    return %c0_i32, %c0_i32_0 : i32, i32
  }
  func.func @transform_2(%arg0: i32) -> (i32, i32) {
    %c0_i32 = arith.constant 0 : i32
    %c0_i32_0 = arith.constant 0 : i32
    %c0_i32_1 = arith.constant 0 : i32
    return %c0_i32, %c0_i32_0 : i32, i32
  }
  func.func @transform_3(%arg0: i32) -> (i32, i32) {
    %c0_i32 = arith.constant 0 : i32
    %c0_i32_0 = arith.constant 0 : i32
    %c0_i32_1 = arith.constant 0 : i32
    return %c0_i32, %c0_i32_0 : i32, i32
  }
  func.func @transform_4(%arg0: i32) -> (i32, i32) {
    %c0_i32 = arith.constant 0 : i32
    %c0_i32_0 = arith.constant 0 : i32
    %c0_i32_1 = arith.constant 0 : i32
    return %c0_i32, %c0_i32_0 : i32, i32
  }
  func.func @transform_5(%arg0: i32) -> (i32, i32) {
    %c0_i32 = arith.constant 0 : i32
    %c0_i32_0 = arith.constant 0 : i32
    %c0_i32_1 = arith.constant 0 : i32
    return %c0_i32, %c0_i32_0 : i32, i32
  }
  func.func @transform_6(%arg0: i32) -> (i32, i32) {
    %c0_i32 = arith.constant 0 : i32
    %c0_i32_0 = arith.constant 0 : i32
    %c0_i32_1 = arith.constant 0 : i32
    return %c0_i32, %c0_i32_0 : i32, i32
  }
  func.func @transform_7(%arg0: i32) -> (i32, i32) {
    %c0_i32 = arith.constant 0 : i32
    %c0_i32_0 = arith.constant 0 : i32
    %c0_i32_1 = arith.constant 0 : i32
    return %c0_i32, %c0_i32_0 : i32, i32
  }
  func.func @transform_8(%arg0: i32) -> (i32, i32) {
    %c0_i32 = arith.constant 0 : i32
    %c0_i32_0 = arith.constant 0 : i32
    %c0_i32_1 = arith.constant 0 : i32
    return %c0_i32, %c0_i32_0 : i32, i32
  }
  func.func @transform_9(%arg0: i32) -> (i32, i32) {
    %c0_i32 = arith.constant 0 : i32
    %c0_i32_0 = arith.constant 0 : i32
    %c0_i32_1 = arith.constant 0 : i32
    return %c0_i32, %c0_i32_0 : i32, i32
  }
  func.func @transform_10(%arg0: i32) -> (i32, i32) {
    %c0_i32 = arith.constant 0 : i32
    %c0_i32_0 = arith.constant 0 : i32
    %c0_i32_1 = arith.constant 0 : i32
    return %c0_i32, %c0_i32_0 : i32, i32
  }
  func.func @transform_11(%arg0: i32) -> (i32, i32) {
    %c0_i32 = arith.constant 0 : i32
    %c0_i32_0 = arith.constant 0 : i32
    %c0_i32_1 = arith.constant 0 : i32
    return %c0_i32, %c0_i32_0 : i32, i32
  }
  func.func @transform_12(%arg0: i32) -> (i32, i32) {
    %c0_i32 = arith.constant 0 : i32
    %c0_i32_0 = arith.constant 0 : i32
    %c0_i32_1 = arith.constant 0 : i32
    return %c0_i32, %c0_i32_0 : i32, i32
  }
  func.func @transform_13(%arg0: i32) -> (i32, i32) {
    %c0_i32 = arith.constant 0 : i32
    %c0_i32_0 = arith.constant 0 : i32
    %c0_i32_1 = arith.constant 0 : i32
    return %c0_i32, %c0_i32_0 : i32, i32
  }
  func.func @transform_14(%arg0: i32) -> (i32, i32) {
    %c0_i32 = arith.constant 0 : i32
    %c0_i32_0 = arith.constant 0 : i32
    %c0_i32_1 = arith.constant 0 : i32
    return %c0_i32, %c0_i32_0 : i32, i32
  }
  func.func @transform_15(%arg0: i32) -> (i32, i32) {
    %c0_i32 = arith.constant 0 : i32
    %c0_i32_0 = arith.constant 0 : i32
    %c0_i32_1 = arith.constant 0 : i32
    return %c0_i32, %c0_i32_0 : i32, i32
  }
  func.func @transform_16(%arg0: i32) -> (i32, i32) {
    %c0_i32 = arith.constant 0 : i32
    %c0_i32_0 = arith.constant 0 : i32
    %c0_i32_1 = arith.constant 0 : i32
    return %c0_i32, %c0_i32_0 : i32, i32
  }
  func.func @transform_17(%arg0: i32) -> (i32, i32) {
    %c0_i32 = arith.constant 0 : i32
    %c0_i32_0 = arith.constant 0 : i32
    return %arg0, %c0_i32 : i32, i32
  }
}

module attributes {stable_mosaic.version = 11 : i64} {
  func.func @heads_kernel(%arg0: i32, %arg1: memref<8x1500xf32, #tpu.memory_space<vmem>>, %arg2: memref<1500x128xf32, #tpu.memory_space<vmem>>, %arg3: memref<1x128xf32, #tpu.memory_space<vmem>>, %arg4: memref<8x128xf32, #tpu.memory_space<vmem>>) attributes {dimension_semantics = [#tpu.dimension_semantics<parallel>], iteration_bounds = array<i64: 1>, scalar_prefetch = 0 : i64, scratch_operands = 0 : i64, tpu.core_type = #tpu.core_type<tc>, window_params = [{transform_indices = @transform_0, window_bounds = array<i64: 8, 1500>}, {pipeline_mode = #tpu.pipeline_mode<synchronous>, transform_indices = @transform_1, window_bounds = array<i64: 1500, 128>}, {pipeline_mode = #tpu.pipeline_mode<synchronous>, transform_indices = @transform_2, window_bounds = array<i64: 1, 128>}, {transform_indices = @transform_3, window_bounds = array<i64: 8, 128>}]} {
    %c0 = arith.constant 0 : index
    %c0_0 = arith.constant 0 : index
    %0 = vector.load %arg1[%c0, %c0_0] : memref<8x1500xf32, #tpu.memory_space<vmem>>, vector<8x1500xf32>
    %c0_1 = arith.constant 0 : index
    %c0_2 = arith.constant 0 : index
    %1 = vector.load %arg2[%c0_1, %c0_2] : memref<1500x128xf32, #tpu.memory_space<vmem>>, vector<1500x128xf32>
    %cst = arith.constant dense<0.000000e+00> : vector<8x128xf32>
    %2 = tpu.matmul %0, %1, %cst {dimension_numbers = #tpu.dot_dimension_numbers<[1], [0], [0], [1], [0, 0, 1, 1], [], []>} : vector<8x1500xf32>, vector<1500x128xf32>, vector<8x128xf32> -> vector<8x128xf32>
    %c0_3 = arith.constant 0 : index
    %c0_4 = arith.constant 0 : index
    %3 = vector.load %arg3[%c0_3, %c0_4] : memref<1x128xf32, #tpu.memory_space<vmem>>, vector<1x128xf32>
    %4 = vector.broadcast %3 : vector<1x128xf32> to vector<8x128xf32>
    %5 = arith.addf %2, %4 : vector<8x128xf32>
    %c0_5 = arith.constant 0 : index
    %c0_6 = arith.constant 0 : index
    %6 = vector.load %arg4[%c0_5, %c0_6] : memref<8x128xf32, #tpu.memory_space<vmem>>, vector<8x128xf32>
    tpu.vector_store %arg4[%c0_5, %c0_6], %5 {strides = array<i32>} : memref<8x128xf32, #tpu.memory_space<vmem>>, vector<8x128xf32>,
    return
  }
  func.func @transform_0(%arg0: i32) -> (i32, i32) {
    %c0_i32 = arith.constant 0 : i32
    %c0_i32_0 = arith.constant 0 : i32
    return %arg0, %c0_i32 : i32, i32
  }
  func.func @transform_1(%arg0: i32) -> (i32, i32) {
    %c0_i32 = arith.constant 0 : i32
    %c0_i32_0 = arith.constant 0 : i32
    %c0_i32_1 = arith.constant 0 : i32
    return %c0_i32, %c0_i32_0 : i32, i32
  }
  func.func @transform_2(%arg0: i32) -> (i32, i32) {
    %c0_i32 = arith.constant 0 : i32
    %c0_i32_0 = arith.constant 0 : i32
    %c0_i32_1 = arith.constant 0 : i32
    return %c0_i32, %c0_i32_0 : i32, i32
  }
  func.func @transform_3(%arg0: i32) -> (i32, i32) {
    %c0_i32 = arith.constant 0 : i32
    %c0_i32_0 = arith.constant 0 : i32
    return %arg0, %c0_i32 : i32, i32
  }
}

</mosaic_0001>

<llo_original>
// kernel: one_d_cnn_forward.3
$region0: #{one_d_cnn_forward.3}
  #allocation0 [shape = 'u32[]', space=smem, size = 0x4, offset = 0x4, fixed_abs, tag = 'smem constant byte address 0x4 - core index']
  #allocation1 [shape = 'u32[72,128]{1,0:T(1,128)}', space=vmem, size = 0x9000, scoped, tag = 'internal scratch']
  %s0 = inlined_call_operand.vmem [shape: f32[8,1500], index: 0, kind: input, shape index: {}]
  %s1 = inlined_call_operand.vmem [shape: f32[1500,128], index: 1, kind: input, shape index: {}]
  %s2 = inlined_call_operand.vmem [shape: f32[1,128], index: 2, kind: input, shape index: {}]
  %s3 = inlined_call_operand.vmem [shape: f32[8,128], index: 3, kind: output, shape index: {}]
  %s4 = sld [smem:[#allocation0]]
  $region22: #{one_d_cnn_forward.3} parent=0
    _
  %s6 = ssub.s32 1, %s4
  %s7 = scalar_select 0, %s6, %s4
  // Predicated region
  $region2: #{one_d_cnn_forward.3} parent=0 // pred_check
    _
  $region3: #{one_d_cnn_forward.3} parent=0 // pred_check_branch
    %9 = sbr.rel (0) target = $region5
  $region4: #{one_d_cnn_forward.3} parent=0 // pred_region
    _
  $region5: #{one_d_cnn_forward.3} parent=0 // pred_fallthru
    _
  // Predicated region
  $region6: #{one_d_cnn_forward.3} parent=0 // pred_check
    _
  $region7: #{one_d_cnn_forward.3} parent=0 // pred_check_branch
    %11 = sbr.rel (0) target = $region9
  $region8: #{one_d_cnn_forward.3} parent=0 // pred_region
    _
  $region9: #{one_d_cnn_forward.3} parent=0 // pred_fallthru
    _
  // Predicated region
  $region10: #{one_d_cnn_forward.3} parent=0 // pred_check
    _
  $region11: #{one_d_cnn_forward.3} parent=0 // pred_check_branch
    %13 = sbr.rel (0) target = $region13
  $region12: #{one_d_cnn_forward.3} parent=0 // pred_region
    _
  $region13: #{one_d_cnn_forward.3} parent=0 // pred_fallthru
    _
  %v14 = vld [vmem:[%s0] sm:$0xff]
  %v15 = vld [vmem:[%s0 + $0x8] sm:$0xff]
  %v16 = vld [vmem:[%s0 + $0x10] sm:$0xff]
  %v17 = vld [vmem:[%s0 + $0x18] sm:$0xff]
  %v18 = vld [vmem:[%s0 + $0x20] sm:$0xff]
  %v19 = vld [vmem:[%s0 + $0x28] sm:$0xff]
  %v20 = vld [vmem:[%s0 + $0x30] sm:$0xff]
  %v21 = vld [vmem:[%s0 + $0x38] sm:$0xff]
  %v22 = vld [vmem:[%s0 + $0x40] sm:$0xff]
  %v23 = vld [vmem:[%s0 + $0x48] sm:$0xff]
  %v24 = vld [vmem:[%s0 + $0x50] sm:$0xff]
  %v25 = vld [vmem:[%s0 + $0x58] sm:$0xff]
  %v26 = vld [vmem:[%s1] sm:$0xff]
  %v27 = vld [vmem:[%s1 + $0x8] sm:$0xff]
  %v28 = vld [vmem:[%s1 + $0x10] sm:$0xff]
  %v29 = vld [vmem:[%s1 + $0x18] sm:$0xff]
  %v30 = vld [vmem:[%s1 + $0x20] sm:$0xff]
  %v31 = vld [vmem:[%s1 + $0x28] sm:$0xff]
  %v32 = vld [vmem:[%s1 + $0x30] sm:$0xff]
  %v33 = vld [vmem:[%s1 + $0x38] sm:$0xff]
  %v34 = vld [vmem:[%s1 + $0x40] sm:$0xff]
  %v35 = vld [vmem:[%s1 + $0x48] sm:$0xff]
  %v36 = vld [vmem:[%s1 + $0x50] sm:$0xff]
  %v37 = vld [vmem:[%s1 + $0x58] sm:$0xff]
  %v38 = vld [vmem:[%s1 + $0x60] sm:$0xff]
  %v39 = vld [vmem:[%s1 + $0x68] sm:$0xff]
  %v40 = vld [vmem:[%s1 + $0x70] sm:$0xff]
  %v41 = vld [vmem:[%s1 + $0x78] sm:$0xff]
  %v42 = vld [vmem:[%s1 + $0x80] sm:$0xff]
  %v43 = vld [vmem:[%s1 + $0x88] sm:$0xff]
  %v44 = vld [vmem:[%s1 + $0x90] sm:$0xff]
  %v45 = vld [vmem:[%s1 + $0x98] sm:$0xff]
  %v46 = vld [vmem:[%s1 + $0xa0] sm:$0xff]
  %v47 = vld [vmem:[%s1 + $0xa8] sm:$0xff]
  %v48 = vld [vmem:[%s1 + $0xb0] sm:$0xff]
  %v49 = vld [vmem:[%s1 + $0xb8] sm:$0xff]
  %v50 = vld [vmem:[%s1 + $0xc0] sm:$0xff]
  %v51 = vld [vmem:[%s1 + $0xc8] sm:$0xff]
  %v52 = vld [vmem:[%s1 + $0xd0] sm:$0xff]
  %v53 = vld [vmem:[%s1 + $0xd8] sm:$0xff]
  %v54 = vld [vmem:[%s1 + $0xe0] sm:$0xff]
  %v55 = vld [vmem:[%s1 + $0xe8] sm:$0xff]
  %v56 = vld [vmem:[%s1 + $0xf0] sm:$0xff]
  %v57 = vld [vmem:[%s1 + $0xf8] sm:$0xff]
  %v58 = vld [vmem:[%s1 + $0x100] sm:$0xff]
  %v59 = vld [vmem:[%s1 + $0x108] sm:$0xff]
  %v60 = vld [vmem:[%s1 + $0x110] sm:$0xff]
  %v61 = vld [vmem:[%s1 + $0x118] sm:$0xff]
  %v62 = vld [vmem:[%s1 + $0x120] sm:$0xff]
  %v63 = vld [vmem:[%s1 + $0x128] sm:$0xff]
  %v64 = vld [vmem:[%s1 + $0x130] sm:$0xff]
  %v65 = vld [vmem:[%s1 + $0x138] sm:$0xff]
  %v66 = vld [vmem:[%s1 + $0x140] sm:$0xff]
  %v67 = vld [vmem:[%s1 + $0x148] sm:$0xff]
  %v68 = vld [vmem:[%s1 + $0x150] sm:$0xff]
  %v69 = vld [vmem:[%s1 + $0x158] sm:$0xff]
  %v70 = vld [vmem:[%s1 + $0x160] sm:$0xff]
  %v71 = vld [vmem:[%s1 + $0x168] sm:$0xff]
  %v72 = vld [vmem:[%s1 + $0x170] sm:$0xff]
  %v73 = vld [vmem:[%s1 + $0x178] sm:$0xff]
  %v74 = vld [vmem:[%s1 + $0x180] sm:$0xff]
  %v75 = vld [vmem:[%s1 + $0x188] sm:$0xff]
  %v76 = vld [vmem:[%s1 + $0x190] sm:$0xff]
  %v77 = vld [vmem:[%s1 + $0x198] sm:$0xff]
  %v78 = vld [vmem:[%s1 + $0x1a0] sm:$0xff]
  %v79 = vld [vmem:[%s1 + $0x1a8] sm:$0xff]
  %v80 = vld [vmem:[%s1 + $0x1b0] sm:$0xff]
  %v81 = vld [vmem:[%s1 + $0x1b8] sm:$0xff]
  %v82 = vld [vmem:[%s1 + $0x1c0] sm:$0xff]
  %v83 = vld [vmem:[%s1 + $0x1c8] sm:$0xff]
  %v84 = vld [vmem:[%s1 + $0x1d0] sm:$0xff]
  %v85 = vld [vmem:[%s1 + $0x1d8] sm:$0xff]
  %v86 = vld [vmem:[%s1 + $0x1e0] sm:$0xff]
  %v87 = vld [vmem:[%s1 + $0x1e8] sm:$0xff]
  %v88 = vld [vmem:[%s1 + $0x1f0] sm:$0xff]
  %v89 = vld [vmem:[%s1 + $0x1f8] sm:$0xff]
  %v90 = vld [vmem:[%s1 + $0x200] sm:$0xff]
  %v91 = vld [vmem:[%s1 + $0x208] sm:$0xff]
  %v92 = vld [vmem:[%s1 + $0x210] sm:$0xff]
  %v93 = vld [vmem:[%s1 + $0x218] sm:$0xff]
  %v94 = vld [vmem:[%s1 + $0x220] sm:$0xff]
  %v95 = vld [vmem:[%s1 + $0x228] sm:$0xff]
  %v96 = vld [vmem:[%s1 + $0x230] sm:$0xff]
  %v97 = vld [vmem:[%s1 + $0x238] sm:$0xff]
  %v98 = vld [vmem:[%s1 + $0x240] sm:$0xff]
  %v99 = vld [vmem:[%s1 + $0x248] sm:$0xff]
  %v100 = vld [vmem:[%s1 + $0x250] sm:$0xff]
  %v101 = vld [vmem:[%s1 + $0x258] sm:$0xff]
  %v102 = vld [vmem:[%s1 + $0x260] sm:$0xff]
  %v103 = vld [vmem:[%s1 + $0x268] sm:$0xff]
  %v104 = vld [vmem:[%s1 + $0x270] sm:$0xff]
  %v105 = vld [vmem:[%s1 + $0x278] sm:$0xff]
  %v106 = vld [vmem:[%s1 + $0x280] sm:$0xff]
  %v107 = vld [vmem:[%s1 + $0x288] sm:$0xff]
  %v108 = vld [vmem:[%s1 + $0x290] sm:$0xff]
  %v109 = vld [vmem:[%s1 + $0x298] sm:$0xff]
  %v110 = vld [vmem:[%s1 + $0x2a0] sm:$0xff]
  %v111 = vld [vmem:[%s1 + $0x2a8] sm:$0xff]
  %v112 = vld [vmem:[%s1 + $0x2b0] sm:$0xff]
  %v113 = vld [vmem:[%s1 + $0x2b8] sm:$0xff]
  %v114 = vld [vmem:[%s1 + $0x2c0] sm:$0xff]
  %v115 = vld [vmem:[%s1 + $0x2c8] sm:$0xff]
  %v116 = vld [vmem:[%s1 + $0x2d0] sm:$0xff]
  %v117 = vld [vmem:[%s1 + $0x2d8] sm:$0xff]
  %v118 = vld [vmem:[%s1 + $0x2e0] sm:$0xff]
  %v119 = vld [vmem:[%s1 + $0x2e8] sm:$0xff]
  %v120 = vld [vmem:[%s1 + $0x2f0] sm:$0xff]
  %v121 = vld [vmem:[%s1 + $0x2f8] sm:$0xff]
  %v122 = vld [vmem:[%s1 + $0x300] sm:$0xff]
  %v123 = vld [vmem:[%s1 + $0x308] sm:$0xff]
  %v124 = vld [vmem:[%s1 + $0x310] sm:$0xff]
  %v125 = vld [vmem:[%s1 + $0x318] sm:$0xff]
  %v126 = vld [vmem:[%s1 + $0x320] sm:$0xff]
  %v127 = vld [vmem:[%s1 + $0x328] sm:$0xff]
  %v128 = vld [vmem:[%s1 + $0x330] sm:$0xff]
  %v129 = vld [vmem:[%s1 + $0x338] sm:$0xff]
  %v130 = vld [vmem:[%s1 + $0x340] sm:$0xff]
  %v131 = vld [vmem:[%s1 + $0x348] sm:$0xff]
  %v132 = vld [vmem:[%s1 + $0x350] sm:$0xff]
  %v133 = vld [vmem:[%s1 + $0x358] sm:$0xff]
  %v134 = vld [vmem:[%s1 + $0x360] sm:$0xff]
  %v135 = vld [vmem:[%s1 + $0x368] sm:$0xff]
  %v136 = vld [vmem:[%s1 + $0x370] sm:$0xff]
  %v137 = vld [vmem:[%s1 + $0x378] sm:$0xff]
  %v138 = vld [vmem:[%s1 + $0x380] sm:$0xff]
  %v139 = vld [vmem:[%s1 + $0x388] sm:$0xff]
  %v140 = vld [vmem:[%s1 + $0x390] sm:$0xff]
  %v141 = vld [vmem:[%s1 + $0x398] sm:$0xff]
  %v142 = vld [vmem:[%s1 + $0x3a0] sm:$0xff]
  %v143 = vld [vmem:[%s1 + $0x3a8] sm:$0xff]
  %v144 = vld [vmem:[%s1 + $0x3b0] sm:$0xff]
  %v145 = vld [vmem:[%s1 + $0x3b8] sm:$0xff]
  %v146 = vld [vmem:[%s1 + $0x3c0] sm:$0xff]
  %v147 = vld [vmem:[%s1 + $0x3c8] sm:$0xff]
  %v148 = vld [vmem:[%s1 + $0x3d0] sm:$0xff]
  %v149 = vld [vmem:[%s1 + $0x3d8] sm:$0xff]
  %v150 = vld [vmem:[%s1 + $0x3e0] sm:$0xff]
  %v151 = vld [vmem:[%s1 + $0x3e8] sm:$0xff]
  %v152 = vld [vmem:[%s1 + $0x3f0] sm:$0xff]
  %v153 = vld [vmem:[%s1 + $0x3f8] sm:$0xff]
  %v154 = vld [vmem:[%s1 + $0x400] sm:$0xff]
  %v155 = vld [vmem:[%s1 + $0x408] sm:$0xff]
  %v156 = vld [vmem:[%s1 + $0x410] sm:$0xff]
  %v157 = vld [vmem:[%s1 + $0x418] sm:$0xff]
  %v158 = vld [vmem:[%s1 + $0x420] sm:$0xff]
  %v159 = vld [vmem:[%s1 + $0x428] sm:$0xff]
  %v160 = vld [vmem:[%s1 + $0x430] sm:$0xff]
  %v161 = vld [vmem:[%s1 + $0x438] sm:$0xff]
  %v162 = vld [vmem:[%s1 + $0x440] sm:$0xff]
  %v163 = vld [vmem:[%s1 + $0x448] sm:$0xff]
  %v164 = vld [vmem:[%s1 + $0x450] sm:$0xff]
  %v165 = vld [vmem:[%s1 + $0x458] sm:$0xff]
  %v166 = vld [vmem:[%s1 + $0x460] sm:$0xff]
  %v167 = vld [vmem:[%s1 + $0x468] sm:$0xff]
  %v168 = vld [vmem:[%s1 + $0x470] sm:$0xff]
  %v169 = vld [vmem:[%s1 + $0x478] sm:$0xff]
  %v170 = vld [vmem:[%s1 + $0x480] sm:$0xff]
  %v171 = vld [vmem:[%s1 + $0x488] sm:$0xff]
  %v172 = vld [vmem:[%s1 + $0x490] sm:$0xff]
  %v173 = vld [vmem:[%s1 + $0x498] sm:$0xff]
  %v174 = vld [vmem:[%s1 + $0x4a0] sm:$0xff]
  %v175 = vld [vmem:[%s1 + $0x4a8] sm:$0xff]
  %v176 = vld [vmem:[%s1 + $0x4b0] sm:$0xff]
  %v177 = vld [vmem:[%s1 + $0x4b8] sm:$0xff]
  %v178 = vld [vmem:[%s1 + $0x4c0] sm:$0xff]
  %v179 = vld [vmem:[%s1 + $0x4c8] sm:$0xff]
  %v180 = vld [vmem:[%s1 + $0x4d0] sm:$0xff]
  %v181 = vld [vmem:[%s1 + $0x4d8] sm:$0xff]
  %v182 = vld [vmem:[%s1 + $0x4e0] sm:$0xff]
  %v183 = vld [vmem:[%s1 + $0x4e8] sm:$0xff]
  %v184 = vld [vmem:[%s1 + $0x4f0] sm:$0xff]
  %v185 = vld [vmem:[%s1 + $0x4f8] sm:$0xff]
  %v186 = vld [vmem:[%s1 + $0x500] sm:$0xff]
  %v187 = vld [vmem:[%s1 + $0x508] sm:$0xff]
  %v188 = vld [vmem:[%s1 + $0x510] sm:$0xff]
  %v189 = vld [vmem:[%s1 + $0x518] sm:$0xff]
  %v190 = vld [vmem:[%s1 + $0x520] sm:$0xff]
  %v191 = vld [vmem:[%s1 + $0x528] sm:$0xff]
  %v192 = vld [vmem:[%s1 + $0x530] sm:$0xff]
  %v193 = vld [vmem:[%s1 + $0x538] sm:$0xff]
  %v194 = vld [vmem:[%s1 + $0x540] sm:$0xff]
  %v195 = vld [vmem:[%s1 + $0x548] sm:$0xff]
  %v196 = vld [vmem:[%s1 + $0x550] sm:$0xff]
  %v197 = vld [vmem:[%s1 + $0x558] sm:$0xff]
  %v198 = vld [vmem:[%s1 + $0x560] sm:$0xff]
  %v199 = vld [vmem:[%s1 + $0x568] sm:$0xff]
  %v200 = vld [vmem:[%s1 + $0x570] sm:$0xff]
  %v201 = vld [vmem:[%s1 + $0x578] sm:$0xff]
  %v202 = vld [vmem:[%s1 + $0x580] sm:$0xff]
  %v203 = vld [vmem:[%s1 + $0x588] sm:$0xff]
  %v204 = vld [vmem:[%s1 + $0x590] sm:$0xff]
  %v205 = vld [vmem:[%s1 + $0x598] sm:$0xff]
  %v206 = vld [vmem:[%s1 + $0x5a0] sm:$0xff]
  %v207 = vld [vmem:[%s1 + $0x5a8] sm:$0xff]
  %v208 = vld [vmem:[%s1 + $0x5b0] sm:$0xff]
  %v209 = vld [vmem:[%s1 + $0x5b8] sm:$0xff]
  %v210 = vld [vmem:[%s1 + $0x5c0] sm:$0xff]
  %v211 = vld [vmem:[%s1 + $0x5c8] sm:$0xff]
  %v212 = vld [vmem:[%s1 + $0x5d0] sm:$0xff]
  %v213 = vld [vmem:[%s1 + $0x5d8] sm:$0xf]
  %v214 = vld [vmem:[%s2] sm:$0x1]
  %v216 = vperm.slane %v214, 0
  %vm218 = vcmask 752640
  %v220 = vsel %vm218, %v25, 0
  %vm222 = vcmask 1043456
  %v224 = vsel %vm222, %v213, 0
  %226 = vmatpush.msra.mxu0 %v41
  %227 = vmatpush.msra.mxu0 %v40
  %228 = vmatpush.msra.mxu0 %v39
  %229 = vmatpush.msra.mxu0 %v38
  %230 = vmatpush.msra.mxu0 %v37
  %231 = vmatpush.msra.mxu0 %v36
  %232 = vmatpush.msra.mxu0 %v35
  %233 = vmatpush.msra.mxu0 %v34
  %234 = vmatpush.msra.mxu0 %v33
  %235 = vmatpush.msra.mxu0 %v32
  %236 = vmatpush.msra.mxu0 %v31
  %237 = vmatpush.msra.mxu0 %v30
  %238 = vmatpush.msra.mxu0 %v29
  %239 = vmatpush.msra.mxu0 %v28
  %240 = vmatpush.msra.mxu0 %v27
  %241 = vmatpush.msra.mxu0 %v26
  %242 = vmatmul.f32.gmra.mxu0 %v14
  %v243 = vpop.f32.mrf.mxu0
  %v244 = vadd.f32 %v216, %v243
  %245 = vdwg.mxu0
  %246 = vmatpush.msra.mxu0 %v57
  %247 = vmatpush.msra.mxu0 %v56
  %248 = vmatpush.msra.mxu0 %v55
  %249 = vmatpush.msra.mxu0 %v54
  %250 = vmatpush.msra.mxu0 %v53
  %251 = vmatpush.msra.mxu0 %v52
  %252 = vmatpush.msra.mxu0 %v51
  %253 = vmatpush.msra.mxu0 %v50
  %254 = vmatpush.msra.mxu0 %v49
  %255 = vmatpush.msra.mxu0 %v48
  %256 = vmatpush.msra.mxu0 %v47
  %257 = vmatpush.msra.mxu0 %v46
  %258 = vmatpush.msra.mxu0 %v45
  %259 = vmatpush.msra.mxu0 %v44
  %260 = vmatpush.msra.mxu0 %v43
  %261 = vmatpush.msra.mxu0 %v42
  %262 = vmatmul.f32.gmra.mxu0 %v15
  %v263 = vpop.f32.mrf.mxu0
  %v264 = vadd.f32 %v244, %v263
  %265 = vdwg.mxu0
  %266 = vmatpush.msra.mxu0 %v73
  %267 = vmatpush.msra.mxu0 %v72
  %268 = vmatpush.msra.mxu0 %v71
  %269 = vmatpush.msra.mxu0 %v70
  %270 = vmatpush.msra.mxu0 %v69
  %271 = vmatpush.msra.mxu0 %v68
  %272 = vmatpush.msra.mxu0 %v67
  %273 = vmatpush.msra.mxu0 %v66
  %274 = vmatpush.msra.mxu0 %v65
  %275 = vmatpush.msra.mxu0 %v64
  %276 = vmatpush.msra.mxu0 %v63
  %277 = vmatpush.msra.mxu0 %v62
  %278 = vmatpush.msra.mxu0 %v61
  %279 = vmatpush.msra.mxu0 %v60
  %280 = vmatpush.msra.mxu0 %v59
  %281 = vmatpush.msra.mxu0 %v58
  %282 = vmatmul.f32.gmra.mxu0 %v16
  %v283 = vpop.f32.mrf.mxu0
  %v284 = vadd.f32 %v264, %v283
  %285 = vdwg.mxu0
  %286 = vmatpush.msra.mxu0 %v89
  %287 = vmatpush.msra.mxu0 %v88
  %288 = vmatpush.msra.mxu0 %v87
  %289 = vmatpush.msra.mxu0 %v86
  %290 = vmatpush.msra.mxu0 %v85
  %291 = vmatpush.msra.mxu0 %v84
  %292 = vmatpush.msra.mxu0 %v83
  %293 = vmatpush.msra.mxu0 %v82
  %294 = vmatpush.msra.mxu0 %v81
  %295 = vmatpush.msra.mxu0 %v80
  %296 = vmatpush.msra.mxu0 %v79
  %297 = vmatpush.msra.mxu0 %v78
  %298 = vmatpush.msra.mxu0 %v77
  %299 = vmatpush.msra.mxu0 %v76
  %300 = vmatpush.msra.mxu0 %v75
  %301 = vmatpush.msra.mxu0 %v74
  %302 = vmatmul.f32.gmra.mxu0 %v17
  %v303 = vpop.f32.mrf.mxu0
  %v304 = vadd.f32 %v284, %v303
  %305 = vdwg.mxu0
  %306 = vmatpush.msra.mxu0 %v105
  %307 = vmatpush.msra.mxu0 %v104
  %308 = vmatpush.msra.mxu0 %v103
  %309 = vmatpush.msra.mxu0 %v102
  %310 = vmatpush.msra.mxu0 %v101
  %311 = vmatpush.msra.mxu0 %v100
  %312 = vmatpush.msra.mxu0 %v99
  %313 = vmatpush.msra.mxu0 %v98
  %314 = vmatpush.msra.mxu0 %v97
  %315 = vmatpush.msra.mxu0 %v96
  %316 = vmatpush.msra.mxu0 %v95
  %317 = vmatpush.msra.mxu0 %v94
  %318 = vmatpush.msra.mxu0 %v93
  %319 = vmatpush.msra.mxu0 %v92
  %320 = vmatpush.msra.mxu0 %v91
  %321 = vmatpush.msra.mxu0 %v90
  %322 = vmatmul.f32.gmra.mxu0 %v18
  %v323 = vpop.f32.mrf.mxu0
  %v324 = vadd.f32 %v304, %v323
  %325 = vdwg.mxu0
  %326 = vmatpush.msra.mxu0 %v121
  %327 = vmatpush.msra.mxu0 %v120
  %328 = vmatpush.msra.mxu0 %v119
  %329 = vmatpush.msra.mxu0 %v118
  %330 = vmatpush.msra.mxu0 %v117
  %331 = vmatpush.msra.mxu0 %v116
  %332 = vmatpush.msra.mxu0 %v115
  %333 = vmatpush.msra.mxu0 %v114
  %334 = vmatpush.msra.mxu0 %v113
  %335 = vmatpush.msra.mxu0 %v112
  %336 = vmatpush.msra.mxu0 %v111
  %337 = vmatpush.msra.mxu0 %v110
  %338 = vmatpush.msra.mxu0 %v109
  %339 = vmatpush.msra.mxu0 %v108
  %340 = vmatpush.msra.mxu0 %v107
  %341 = vmatpush.msra.mxu0 %v106
  %342 = vmatmul.f32.gmra.mxu0 %v19
  %v343 = vpop.f32.mrf.mxu0
  %v344 = vadd.f32 %v324, %v343
  %345 = vdwg.mxu0
  %346 = vmatpush.msra.mxu0 %v137
  %347 = vmatpush.msra.mxu0 %v136
  %348 = vmatpush.msra.mxu0 %v135
  %349 = vmatpush.msra.mxu0 %v134
  %350 = vmatpush.msra.mxu0 %v133
  %351 = vmatpush.msra.mxu0 %v132
  %352 = vmatpush.msra.mxu0 %v131
  %353 = vmatpush.msra.mxu0 %v130
  %354 = vmatpush.msra.mxu0 %v129
  %355 = vmatpush.msra.mxu0 %v128
  %356 = vmatpush.msra.mxu0 %v127
  %357 = vmatpush.msra.mxu0 %v126
  %358 = vmatpush.msra.mxu0 %v125
  %359 = vmatpush.msra.mxu0 %v124
  %360 = vmatpush.msra.mxu0 %v123
  %361 = vmatpush.msra.mxu0 %v122
  %362 = vmatmul.f32.gmra.mxu0 %v20
  %v363 = vpop.f32.mrf.mxu0
  %v364 = vadd.f32 %v344, %v363
  %365 = vdwg.mxu0
  %366 = vmatpush.msra.mxu0 %v153
  %367 = vmatpush.msra.mxu0 %v152
  %368 = vmatpush.msra.mxu0 %v151
  %369 = vmatpush.msra.mxu0 %v150
  %370 = vmatpush.msra.mxu0 %v149
  %371 = vmatpush.msra.mxu0 %v148
  %372 = vmatpush.msra.mxu0 %v147
  %373 = vmatpush.msra.mxu0 %v146
  %374 = vmatpush.msra.mxu0 %v145
  %375 = vmatpush.msra.mxu0 %v144
  %376 = vmatpush.msra.mxu0 %v143
  %377 = vmatpush.msra.mxu0 %v142
  %378 = vmatpush.msra.mxu0 %v141
  %379 = vmatpush.msra.mxu0 %v140
  %380 = vmatpush.msra.mxu0 %v139
  %381 = vmatpush.msra.mxu0 %v138
  %382 = vmatmul.f32.gmra.mxu0 %v21
  %v383 = vpop.f32.mrf.mxu0
  %v384 = vadd.f32 %v364, %v383
  %385 = vdwg.mxu0
  %386 = vmatpush.msra.mxu0 %v169
  %387 = vmatpush.msra.mxu0 %v168
  %388 = vmatpush.msra.mxu0 %v167
  %389 = vmatpush.msra.mxu0 %v166
  %390 = vmatpush.msra.mxu0 %v165
  %391 = vmatpush.msra.mxu0 %v164
  %392 = vmatpush.msra.mxu0 %v163
  %393 = vmatpush.msra.mxu0 %v162
  %394 = vmatpush.msra.mxu0 %v161
  %395 = vmatpush.msra.mxu0 %v160
  %396 = vmatpush.msra.mxu0 %v159
  %397 = vmatpush.msra.mxu0 %v158
  %398 = vmatpush.msra.mxu0 %v157
  %399 = vmatpush.msra.mxu0 %v156
  %400 = vmatpush.msra.mxu0 %v155
  %401 = vmatpush.msra.mxu0 %v154
  %402 = vmatmul.f32.gmra.mxu0 %v22
  %v403 = vpop.f32.mrf.mxu0
  %v404 = vadd.f32 %v384, %v403
  %405 = vdwg.mxu0
  %406 = vmatpush.msra.mxu0 %v185
  %407 = vmatpush.msra.mxu0 %v184
  %408 = vmatpush.msra.mxu0 %v183
  %409 = vmatpush.msra.mxu0 %v182
  %410 = vmatpush.msra.mxu0 %v181
  %411 = vmatpush.msra.mxu0 %v180
  %412 = vmatpush.msra.mxu0 %v179
  %413 = vmatpush.msra.mxu0 %v178
  %414 = vmatpush.msra.mxu0 %v177
  %415 = vmatpush.msra.mxu0 %v176
  %416 = vmatpush.msra.mxu0 %v175
  %417 = vmatpush.msra.mxu0 %v174
  %418 = vmatpush.msra.mxu0 %v173
  %419 = vmatpush.msra.mxu0 %v172
  %420 = vmatpush.msra.mxu0 %v171
  %421 = vmatpush.msra.mxu0 %v170
  %422 = vmatmul.f32.gmra.mxu0 %v23
  %v423 = vpop.f32.mrf.mxu0
  %v424 = vadd.f32 %v404, %v423
  %425 = vdwg.mxu0
  %426 = vmatpush.msra.mxu0 %v201
  %427 = vmatpush.msra.mxu0 %v200
  %428 = vmatpush.msra.mxu0 %v199
  %429 = vmatpush.msra.mxu0 %v198
  %430 = vmatpush.msra.mxu0 %v197
  %431 = vmatpush.msra.mxu0 %v196
  %432 = vmatpush.msra.mxu0 %v195
  %433 = vmatpush.msra.mxu0 %v194
  %434 = vmatpush.msra.mxu0 %v193
  %435 = vmatpush.msra.mxu0 %v192
  %436 = vmatpush.msra.mxu0 %v191
  %437 = vmatpush.msra.mxu0 %v190
  %438 = vmatpush.msra.mxu0 %v189
  %439 = vmatpush.msra.mxu0 %v188
  %440 = vmatpush.msra.mxu0 %v187
  %441 = vmatpush.msra.mxu0 %v186
  %442 = vmatmul.f32.gmra.mxu0 %v24
  %v443 = vpop.f32.mrf.mxu0
  %v444 = vadd.f32 %v424, %v443
  %445 = vdwg.mxu0
  %446 = vmatpush.msra.mxu0 0.0
  %447 = vmatpush.msra.mxu0 0.0
  %448 = vmatpush.msra.mxu0 0.0
  %449 = vmatpush.msra.mxu0 0.0
  %450 = vmatpush.msra.mxu0 %v224
  %451 = vmatpush.msra.mxu0 %v212
  %452 = vmatpush.msra.mxu0 %v211
  %453 = vmatpush.msra.mxu0 %v210
  %454 = vmatpush.msra.mxu0 %v209
  %455 = vmatpush.msra.mxu0 %v208
  %456 = vmatpush.msra.mxu0 %v207
  %457 = vmatpush.msra.mxu0 %v206
  %458 = vmatpush.msra.mxu0 %v205
  %459 = vmatpush.msra.mxu0 %v204
  %460 = vmatpush.msra.mxu0 %v203
  %461 = vmatpush.msra.mxu0 %v202
  %462 = vmatmul.f32.gmra.mxu0 %v220
  %v463 = vpop.f32.mrf.mxu0
  %v464 = vadd.f32 %v444, %v463
  %465 = vdwg.mxu0
  %466 = vst [vmem:[%s3] sm:$0xff] %v464
  // Predicated region
  $region14: #{one_d_cnn_forward.3} parent=0 // pred_check
    _
  $region15: #{one_d_cnn_forward.3} parent=0 // pred_check_branch
    %468 = sbr.rel (0) target = $region17
  $region16: #{one_d_cnn_forward.3} parent=0 // pred_region
    _
  $region17: #{one_d_cnn_forward.3} parent=0 // pred_fallthru
    _
  // Predicated region
  $region18: #{one_d_cnn_forward.3} parent=0 // pred_check
    _
  $region19: #{one_d_cnn_forward.3} parent=0 // pred_check_branch
    %470 = sbr.rel (0) target = $region21
  $region20: #{one_d_cnn_forward.3} parent=0 // pred_region
    _
  $region21: #{one_d_cnn_forward.3} parent=0 // pred_fallthru
    _

// kernel: one_d_cnn_forward.2
$region0: #{one_d_cnn_forward.2}
  #allocation0 [shape = 'u32[]', space=smem, size = 0x4, offset = 0x4, fixed_abs, tag = 'smem constant byte address 0x4 - core index']
  #allocation1 [shape = 'u32[72,128]{1,0:T(1,128)}', space=vmem, size = 0x9000, scoped, tag = 'internal scratch']
  %s0 = inlined_call_operand.vmem [shape: f32[1,6,512], index: 0, kind: input, shape index: {}]
  %s1 = inlined_call_operand.vmem [shape: f32[32,4], index: 1, kind: input, shape index: {}]
  %s2 = inlined_call_operand.vmem [shape: f32[32,1], index: 2, kind: input, shape index: {}]
  %s3 = inlined_call_operand.vmem [shape: f32[32,1], index: 3, kind: input, shape index: {}]
  %s4 = inlined_call_operand.vmem [shape: f32[32,160], index: 4, kind: input, shape index: {}]
  %s5 = inlined_call_operand.vmem [shape: f32[32,1], index: 5, kind: input, shape index: {}]
  %s6 = inlined_call_operand.vmem [shape: f32[32,1], index: 6, kind: input, shape index: {}]
  %s7 = inlined_call_operand.vmem [shape: f32[256,256], index: 7, kind: input, shape index: {}]
  %s8 = inlined_call_operand.vmem [shape: f32[1,256], index: 8, kind: input, shape index: {}]
  %s9 = inlined_call_operand.vmem [shape: f32[32,1], index: 9, kind: input, shape index: {}]
  %s10 = inlined_call_operand.vmem [shape: f32[32,1], index: 10, kind: input, shape index: {}]
  %s11 = inlined_call_operand.vmem [shape: f32[256,128], index: 11, kind: input, shape index: {}]
  %s12 = inlined_call_operand.vmem [shape: f32[1,128], index: 12, kind: input, shape index: {}]
  %s13 = inlined_call_operand.vmem [shape: f32[32,1], index: 13, kind: input, shape index: {}]
  %s14 = inlined_call_operand.vmem [shape: f32[32,1], index: 14, kind: input, shape index: {}]
  %s15 = inlined_call_operand.vmem [shape: f32[128,128], index: 15, kind: input, shape index: {}]
  %s16 = inlined_call_operand.vmem [shape: f32[1,128], index: 16, kind: input, shape index: {}]
  %s17 = inlined_call_operand.vmem [shape: f32[64,128], index: 17, kind: output, shape index: {}]
  %s18 = sld [smem:[#allocation0]]
  $region78: #{one_d_cnn_forward.2} parent=0
    _
  %s20 = ssub.s32 1, %s18
  %s21 = scalar_select 0, %s20, %s18
  // Predicated region
  $region2: #{one_d_cnn_forward.2} parent=0 // pred_check
    _
  $region3: #{one_d_cnn_forward.2} parent=0 // pred_check_branch
    %23 = sbr.rel (0) target = $region5
  $region4: #{one_d_cnn_forward.2} parent=0 // pred_region
    _
  $region5: #{one_d_cnn_forward.2} parent=0 // pred_fallthru
    _
  // Predicated region
  $region6: #{one_d_cnn_forward.2} parent=0 // pred_check
    _
  $region7: #{one_d_cnn_forward.2} parent=0 // pred_check_branch
    %25 = sbr.rel (0) target = $region9
  $region8: #{one_d_cnn_forward.2} parent=0 // pred_region
    _
  $region9: #{one_d_cnn_forward.2} parent=0 // pred_fallthru
    _
  // Predicated region
  $region10: #{one_d_cnn_forward.2} parent=0 // pred_check
    _
  $region11: #{one_d_cnn_forward.2} parent=0 // pred_check_branch
    %27 = sbr.rel (0) target = $region13
  $region12: #{one_d_cnn_forward.2} parent=0 // pred_region
    _
  $region13: #{one_d_cnn_forward.2} parent=0 // pred_fallthru
    _
  // Predicated region
  $region14: #{one_d_cnn_forward.2} parent=0 // pred_check
    _
  $region15: #{one_d_cnn_forward.2} parent=0 // pred_check_branch
    %29 = sbr.rel (0) target = $region17
  $region16: #{one_d_cnn_forward.2} parent=0 // pred_region
    _
  $region17: #{one_d_cnn_forward.2} parent=0 // pred_fallthru
    _
  // Predicated region
  $region18: #{one_d_cnn_forward.2} parent=0 // pred_check
    _
  $region19: #{one_d_cnn_forward.2} parent=0 // pred_check_branch
    %31 = sbr.rel (0) target = $region21
  $region20: #{one_d_cnn_forward.2} parent=0 // pred_region
    _
  $region21: #{one_d_cnn_forward.2} parent=0 // pred_fallthru
    _
  // Predicated region
  $region22: #{one_d_cnn_forward.2} parent=0 // pred_check
    _
  $region23: #{one_d_cnn_forward.2} parent=0 // pred_check_branch
    %33 = sbr.rel (0) target = $region25
  $region24: #{one_d_cnn_forward.2} parent=0 // pred_region
    _
  $region25: #{one_d_cnn_forward.2} parent=0 // pred_fallthru
    _
  // Predicated region
  $region26: #{one_d_cnn_forward.2} parent=0 // pred_check
    _
  $region27: #{one_d_cnn_forward.2} parent=0 // pred_check_branch
    %35 = sbr.rel (0) target = $region29
  $region28: #{one_d_cnn_forward.2} parent=0 // pred_region
    _
  $region29: #{one_d_cnn_forward.2} parent=0 // pred_fallthru
    _
  // Predicated region
  $region30: #{one_d_cnn_forward.2} parent=0 // pred_check
    _
  $region31: #{one_d_cnn_forward.2} parent=0 // pred_check_branch
    %37 = sbr.rel (0) target = $region33
  $region32: #{one_d_cnn_forward.2} parent=0 // pred_region
    _
  $region33: #{one_d_cnn_forward.2} parent=0 // pred_fallthru
    _
  // Predicated region
  $region34: #{one_d_cnn_forward.2} parent=0 // pred_check
    _
  $region35: #{one_d_cnn_forward.2} parent=0 // pred_check_branch
    %39 = sbr.rel (0) target = $region37
  $region36: #{one_d_cnn_forward.2} parent=0 // pred_region
    _
  $region37: #{one_d_cnn_forward.2} parent=0 // pred_fallthru
    _
  // Predicated region
  $region38: #{one_d_cnn_forward.2} parent=0 // pred_check
    _
  $region39: #{one_d_cnn_forward.2} parent=0 // pred_check_branch
    %41 = sbr.rel (0) target = $region41
  $region40: #{one_d_cnn_forward.2} parent=0 // pred_region
    _
  $region41: #{one_d_cnn_forward.2} parent=0 // pred_fallthru
    _
  // Predicated region
  $region42: #{one_d_cnn_forward.2} parent=0 // pred_check
    _
  $region43: #{one_d_cnn_forward.2} parent=0 // pred_check_branch
    %43 = sbr.rel (0) target = $region45
  $region44: #{one_d_cnn_forward.2} parent=0 // pred_region
    _
  $region45: #{one_d_cnn_forward.2} parent=0 // pred_fallthru
    _
  // Predicated region
  $region46: #{one_d_cnn_forward.2} parent=0 // pred_check
    _
  $region47: #{one_d_cnn_forward.2} parent=0 // pred_check_branch
    %45 = sbr.rel (0) target = $region49
  $region48: #{one_d_cnn_forward.2} parent=0 // pred_region
    _
  $region49: #{one_d_cnn_forward.2} parent=0 // pred_fallthru
    _
  // Predicated region
  $region50: #{one_d_cnn_forward.2} parent=0 // pred_check
    _
  $region51: #{one_d_cnn_forward.2} parent=0 // pred_check_branch
    %47 = sbr.rel (0) target = $region53
  $region52: #{one_d_cnn_forward.2} parent=0 // pred_region
    _
  $region53: #{one_d_cnn_forward.2} parent=0 // pred_fallthru
    _
  // Predicated region
  $region54: #{one_d_cnn_forward.2} parent=0 // pred_check
    _
  $region55: #{one_d_cnn_forward.2} parent=0 // pred_check_branch
    %49 = sbr.rel (0) target = $region57
  $region56: #{one_d_cnn_forward.2} parent=0 // pred_region
    _
  $region57: #{one_d_cnn_forward.2} parent=0 // pred_fallthru
    _
  // Predicated region
  $region58: #{one_d_cnn_forward.2} parent=0 // pred_check
    _
  $region59: #{one_d_cnn_forward.2} parent=0 // pred_check_branch
    %51 = sbr.rel (0) target = $region61
  $region60: #{one_d_cnn_forward.2} parent=0 // pred_region
    _
  $region61: #{one_d_cnn_forward.2} parent=0 // pred_fallthru
    _
  // Predicated region
  $region62: #{one_d_cnn_forward.2} parent=0 // pred_check
    _
  $region63: #{one_d_cnn_forward.2} parent=0 // pred_check_branch
    %53 = sbr.rel (0) target = $region65
  $region64: #{one_d_cnn_forward.2} parent=0 // pred_region
    _
  $region65: #{one_d_cnn_forward.2} parent=0 // pred_fallthru
    _
  // Predicated region
  $region66: #{one_d_cnn_forward.2} parent=0 // pred_check
    _
  $region67: #{one_d_cnn_forward.2} parent=0 // pred_check_branch
    %55 = sbr.rel (0) target = $region69
  $region68: #{one_d_cnn_forward.2} parent=0 // pred_region
    _
  $region69: #{one_d_cnn_forward.2} parent=0 // pred_fallthru
    _
  %v56 = vld [vmem:[%s0] sm:$0x3f]
  %v57 = vld [vmem:[%s0 + $0x8] sm:$0x3f]
  %v58 = vld [vmem:[%s0 + $0x10] sm:$0x3f]
  %v59 = vld [vmem:[%s0 + $0x18] sm:$0x3f]
  %v60 = vld [vmem:[%s1] sm:$0xff]
  %v61 = vld [vmem:[%s1 + $0x8] sm:$0xff]
  %v62 = vld [vmem:[%s1 + $0x10] sm:$0xff]
  %v63 = vld [vmem:[%s1 + $0x18] sm:$0xff]
  %65 = vset.pattern.permute.xlu0 0
  %66 = vperm.xlu0 %65, %v60
  %v67 = vpop.permute.xlu0 %66
  %70 = vset.pattern.permute.xlu0 0
  %71 = vperm.xlu0 %70, %v61
  %v72 = vpop.permute.xlu0 %71
  %75 = vset.pattern.permute.xlu0 0
  %76 = vperm.xlu0 %75, %v62
  %v77 = vpop.permute.xlu0 %76
  %80 = vset.pattern.permute.xlu0 0
  %81 = vperm.xlu0 %80, %v63
  %v82 = vpop.permute.xlu0 %81
  %v84 = vperm.slane %v56, 0
  %v85 = vperm.slane %v57, 0
  %v86 = vperm.slane %v58, 0
  %v87 = vperm.slane %v59, 0
  %v88 = vmul.f32 %v67, %v84
  %v89 = vmul.f32 %v67, %v85
  %v90 = vmul.f32 %v67, %v86
  %v91 = vmul.f32 %v67, %v87
  %v92 = vmul.f32 %v72, %v84
  %v93 = vmul.f32 %v72, %v85
  %v94 = vmul.f32 %v72, %v86
  %v95 = vmul.f32 %v72, %v87
  %v96 = vmul.f32 %v77, %v84
  %v97 = vmul.f32 %v77, %v85
  %v98 = vmul.f32 %v77, %v86
  %v99 = vmul.f32 %v77, %v87
  %v100 = vmul.f32 %v82, %v84
  %v101 = vmul.f32 %v82, %v85
  %v102 = vmul.f32 %v82, %v86
  %v103 = vmul.f32 %v82, %v87
  %104 = vset.pattern.permute.xlu0 1
  %105 = vperm.xlu0 %104, %v60
  %v106 = vpop.permute.xlu0 %105
  %108 = vset.pattern.permute.xlu0 1
  %109 = vperm.xlu0 %108, %v61
  %v110 = vpop.permute.xlu0 %109
  %112 = vset.pattern.permute.xlu0 1
  %113 = vperm.xlu0 %112, %v62
  %v114 = vpop.permute.xlu0 %113
  %116 = vset.pattern.permute.xlu0 1
  %117 = vperm.xlu0 %116, %v63
  %v118 = vpop.permute.xlu0 %117
  %v120 = vperm.slane %v56, 1
  %v121 = vperm.slane %v57, 1
  %v122 = vperm.slane %v58, 1
  %v123 = vperm.slane %v59, 1
  %v124 = vmul.f32 %v106, %v120
  %v125 = vmul.f32 %v106, %v121
  %v126 = vmul.f32 %v106, %v122
  %v127 = vmul.f32 %v106, %v123
  %v128 = vmul.f32 %v110, %v120
  %v129 = vmul.f32 %v110, %v121
  %v130 = vmul.f32 %v110, %v122
  %v131 = vmul.f32 %v110, %v123
  %v132 = vmul.f32 %v114, %v120
  %v133 = vmul.f32 %v114, %v121
  %v134 = vmul.f32 %v114, %v122
  %v135 = vmul.f32 %v114, %v123
  %v136 = vmul.f32 %v118, %v120
  %v137 = vmul.f32 %v118, %v121
  %v138 = vmul.f32 %v118, %v122
  %v139 = vmul.f32 %v118, %v123
  %v140 = vadd.f32 %v88, %v124
  %v141 = vadd.f32 %v89, %v125
  %v142 = vadd.f32 %v90, %v126
  %v143 = vadd.f32 %v91, %v127
  %v144 = vadd.f32 %v92, %v128
  %v145 = vadd.f32 %v93, %v129
  %v146 = vadd.f32 %v94, %v130
  %v147 = vadd.f32 %v95, %v131
  %v148 = vadd.f32 %v96, %v132
  %v149 = vadd.f32 %v97, %v133
  %v150 = vadd.f32 %v98, %v134
  %v151 = vadd.f32 %v99, %v135
  %v152 = vadd.f32 %v100, %v136
  %v153 = vadd.f32 %v101, %v137
  %v154 = vadd.f32 %v102, %v138
  %v155 = vadd.f32 %v103, %v139
  %156 = vset.pattern.permute.xlu0 2
  %157 = vperm.xlu0 %156, %v60
  %v158 = vpop.permute.xlu0 %157
  %160 = vset.pattern.permute.xlu0 2
  %161 = vperm.xlu0 %160, %v61
  %v162 = vpop.permute.xlu0 %161
  %164 = vset.pattern.permute.xlu0 2
  %165 = vperm.xlu0 %164, %v62
  %v166 = vpop.permute.xlu0 %165
  %168 = vset.pattern.permute.xlu0 2
  %169 = vperm.xlu0 %168, %v63
  %v170 = vpop.permute.xlu0 %169
  %v172 = vperm.slane %v56, 2
  %v173 = vperm.slane %v57, 2
  %v174 = vperm.slane %v58, 2
  %v175 = vperm.slane %v59, 2
  %v176 = vmul.f32 %v158, %v172
  %v177 = vmul.f32 %v158, %v173
  %v178 = vmul.f32 %v158, %v174
  %v179 = vmul.f32 %v158, %v175
  %v180 = vmul.f32 %v162, %v172
  %v181 = vmul.f32 %v162, %v173
  %v182 = vmul.f32 %v162, %v174
  %v183 = vmul.f32 %v162, %v175
  %v184 = vmul.f32 %v166, %v172
  %v185 = vmul.f32 %v166, %v173
  %v186 = vmul.f32 %v166, %v174
  %v187 = vmul.f32 %v166, %v175
  %v188 = vmul.f32 %v170, %v172
  %v189 = vmul.f32 %v170, %v173
  %v190 = vmul.f32 %v170, %v174
  %v191 = vmul.f32 %v170, %v175
  %v192 = vadd.f32 %v140, %v176
  %v193 = vadd.f32 %v141, %v177
  %v194 = vadd.f32 %v142, %v178
  %v195 = vadd.f32 %v143, %v179
  %v196 = vadd.f32 %v144, %v180
  %v197 = vadd.f32 %v145, %v181
  %v198 = vadd.f32 %v146, %v182
  %v199 = vadd.f32 %v147, %v183
  %v200 = vadd.f32 %v148, %v184
  %v201 = vadd.f32 %v149, %v185
  %v202 = vadd.f32 %v150, %v186
  %v203 = vadd.f32 %v151, %v187
  %v204 = vadd.f32 %v152, %v188
  %v205 = vadd.f32 %v153, %v189
  %v206 = vadd.f32 %v154, %v190
  %v207 = vadd.f32 %v155, %v191
  %208 = vset.pattern.permute.xlu0 3
  %209 = vperm.xlu0 %208, %v60
  %v210 = vpop.permute.xlu0 %209
  %212 = vset.pattern.permute.xlu0 3
  %213 = vperm.xlu0 %212, %v61
  %v214 = vpop.permute.xlu0 %213
  %216 = vset.pattern.permute.xlu0 3
  %217 = vperm.xlu0 %216, %v62
  %v218 = vpop.permute.xlu0 %217
  %220 = vset.pattern.permute.xlu0 3
  %221 = vperm.xlu0 %220, %v63
  %v222 = vpop.permute.xlu0 %221
  %v224 = vperm.slane %v56, 3
  %v225 = vperm.slane %v57, 3
  %v226 = vperm.slane %v58, 3
  %v227 = vperm.slane %v59, 3
  %v228 = vmul.f32 %v210, %v224
  %v229 = vmul.f32 %v210, %v225
  %v230 = vmul.f32 %v210, %v226
  %v231 = vmul.f32 %v210, %v227
  %v232 = vmul.f32 %v214, %v224
  %v233 = vmul.f32 %v214, %v225
  %v234 = vmul.f32 %v214, %v226
  %v235 = vmul.f32 %v214, %v227
  %v236 = vmul.f32 %v218, %v224
  %v237 = vmul.f32 %v218, %v225
  %v238 = vmul.f32 %v218, %v226
  %v239 = vmul.f32 %v218, %v227
  %v240 = vmul.f32 %v222, %v224
  %v241 = vmul.f32 %v222, %v225
  %v242 = vmul.f32 %v222, %v226
  %v243 = vmul.f32 %v222, %v227
  %v244 = vadd.f32 %v192, %v228
  %v245 = vadd.f32 %v193, %v229
  %v246 = vadd.f32 %v194, %v230
  %v247 = vadd.f32 %v195, %v231
  %v248 = vadd.f32 %v196, %v232
  %v249 = vadd.f32 %v197, %v233
  %v250 = vadd.f32 %v198, %v234
  %v251 = vadd.f32 %v199, %v235
  %v252 = vadd.f32 %v200, %v236
  %v253 = vadd.f32 %v201, %v237
  %v254 = vadd.f32 %v202, %v238
  %v255 = vadd.f32 %v203, %v239
  %v256 = vadd.f32 %v204, %v240
  %v257 = vadd.f32 %v205, %v241
  %v258 = vadd.f32 %v206, %v242
  %v259 = vadd.f32 %v207, %v243
  %v260 = vmul.f32 %v67, %v224
  %v261 = vmul.f32 %v67, %v225
  %v262 = vmul.f32 %v67, %v226
  %v263 = vmul.f32 %v67, %v227
  %v264 = vmul.f32 %v72, %v224
  %v265 = vmul.f32 %v72, %v225
  %v266 = vmul.f32 %v72, %v226
  %v267 = vmul.f32 %v72, %v227
  %v268 = vmul.f32 %v77, %v224
  %v269 = vmul.f32 %v77, %v225
  %v270 = vmul.f32 %v77, %v226
  %v271 = vmul.f32 %v77, %v227
  %v272 = vmul.f32 %v82, %v224
  %v273 = vmul.f32 %v82, %v225
  %v274 = vmul.f32 %v82, %v226
  %v275 = vmul.f32 %v82, %v227
  %v276 = vperm.slane %v56, 4
  %v277 = vperm.slane %v57, 4
  %v278 = vperm.slane %v58, 4
  %v279 = vperm.slane %v59, 4
  %v280 = vmul.f32 %v106, %v276
  %v281 = vmul.f32 %v106, %v277
  %v282 = vmul.f32 %v106, %v278
  %v283 = vmul.f32 %v106, %v279
  %v284 = vmul.f32 %v110, %v276
  %v285 = vmul.f32 %v110, %v277
  %v286 = vmul.f32 %v110, %v278
  %v287 = vmul.f32 %v110, %v279
  %v288 = vmul.f32 %v114, %v276
  %v289 = vmul.f32 %v114, %v277
  %v290 = vmul.f32 %v114, %v278
  %v291 = vmul.f32 %v114, %v279
  %v292 = vmul.f32 %v118, %v276
  %v293 = vmul.f32 %v118, %v277
  %v294 = vmul.f32 %v118, %v278
  %v295 = vmul.f32 %v118, %v279
  %v296 = vadd.f32 %v260, %v280
  %v297 = vadd.f32 %v261, %v281
  %v298 = vadd.f32 %v262, %v282
  %v299 = vadd.f32 %v263, %v283
  %v300 = vadd.f32 %v264, %v284
  %v301 = vadd.f32 %v265, %v285
  %v302 = vadd.f32 %v266, %v286
  %v303 = vadd.f32 %v267, %v287
  %v304 = vadd.f32 %v268, %v288
  %v305 = vadd.f32 %v269, %v289
  %v306 = vadd.f32 %v270, %v290
  %v307 = vadd.f32 %v271, %v291
  %v308 = vadd.f32 %v272, %v292
  %v309 = vadd.f32 %v273, %v293
  %v310 = vadd.f32 %v274, %v294
  %v311 = vadd.f32 %v275, %v295
  %v312 = vperm.slane %v56, 5
  %v313 = vperm.slane %v57, 5
  %v314 = vperm.slane %v58, 5
  %v315 = vperm.slane %v59, 5
  %v316 = vmul.f32 %v158, %v312
  %v317 = vmul.f32 %v158, %v313
  %v318 = vmul.f32 %v158, %v314
  %v319 = vmul.f32 %v158, %v315
  %v320 = vmul.f32 %v162, %v312
  %v321 = vmul.f32 %v162, %v313
  %v322 = vmul.f32 %v162, %v314
  %v323 = vmul.f32 %v162, %v315
  %v324 = vmul.f32 %v166, %v312
  %v325 = vmul.f32 %v166, %v313
  %v326 = vmul.f32 %v166, %v314
  %v327 = vmul.f32 %v166, %v315
  %v328 = vmul.f32 %v170, %v312
  %v329 = vmul.f32 %v170, %v313
  %v330 = vmul.f32 %v170, %v314
  %v331 = vmul.f32 %v170, %v315
  %v332 = vadd.f32 %v296, %v316
  %v333 = vadd.f32 %v297, %v317
  %v334 = vadd.f32 %v298, %v318
  %v335 = vadd.f32 %v299, %v319
  %v336 = vadd.f32 %v300, %v320
  %v337 = vadd.f32 %v301, %v321
  %v338 = vadd.f32 %v302, %v322
  %v339 = vadd.f32 %v303, %v323
  %v340 = vadd.f32 %v304, %v324
  %v341 = vadd.f32 %v305, %v325
  %v342 = vadd.f32 %v306, %v326
  %v343 = vadd.f32 %v307, %v327
  %v344 = vadd.f32 %v308, %v328
  %v345 = vadd.f32 %v309, %v329
  %v346 = vadd.f32 %v310, %v330
  %v347 = vadd.f32 %v311, %v331
  %352 = vrot.lane.b32.xlu0 %v56, 127
  %v353 = vpop.permute.xlu0 %352
  %354 = vrot.lane.b32.xlu0 %v57, 127
  %v355 = vpop.permute.xlu0 %354
  %356 = vrot.lane.b32.xlu0 %v58, 127
  %v357 = vpop.permute.xlu0 %356
  %358 = vrot.lane.b32.xlu0 %v59, 127
  %v359 = vpop.permute.xlu0 %358
  %vm360 = vcmask 1039360
  %v361 = vsel %vm360, %v353, %v355
  %v362 = vsel %vm360, %v355, %v357
  %v363 = vsel %vm360, %v357, %v359
  %v368 = vsel %vm360, %v359, 0.0
  %v369 = vperm.slane %v361, 0
  %v370 = vperm.slane %v362, 0
  %v371 = vperm.slane %v363, 0
  %v372 = vperm.slane %v368, 0
  %v373 = vmul.f32 %v210, %v369
  %v374 = vmul.f32 %v210, %v370
  %v375 = vmul.f32 %v210, %v371
  %v376 = vmul.f32 %v210, %v372
  %v377 = vmul.f32 %v214, %v369
  %v378 = vmul.f32 %v214, %v370
  %v379 = vmul.f32 %v214, %v371
  %v380 = vmul.f32 %v214, %v372
  %v381 = vmul.f32 %v218, %v369
  %v382 = vmul.f32 %v218, %v370
  %v383 = vmul.f32 %v218, %v371
  %v384 = vmul.f32 %v218, %v372
  %v385 = vmul.f32 %v222, %v369
  %v386 = vmul.f32 %v222, %v370
  %v387 = vmul.f32 %v222, %v371
  %v388 = vmul.f32 %v222, %v372
  %v389 = vadd.f32 %v332, %v373
  %v390 = vadd.f32 %v333, %v374
  %v391 = vadd.f32 %v334, %v375
  %v392 = vadd.f32 %v335, %v376
  %v393 = vadd.f32 %v336, %v377
  %v394 = vadd.f32 %v337, %v378
  %v395 = vadd.f32 %v338, %v379
  %v396 = vadd.f32 %v339, %v380
  %v397 = vadd.f32 %v340, %v381
  %v398 = vadd.f32 %v341, %v382
  %v399 = vadd.f32 %v342, %v383
  %v400 = vadd.f32 %v343, %v384
  %v401 = vadd.f32 %v344, %v385
  %v402 = vadd.f32 %v345, %v386
  %v403 = vadd.f32 %v346, %v387
  %v404 = vadd.f32 %v347, %v388
  %v405 = vld [vmem:[%s2] sm:$0xff]
  %v406 = vld [vmem:[%s2 + $0x8] sm:$0xff]
  %v407 = vld [vmem:[%s2 + $0x10] sm:$0xff]
  %v408 = vld [vmem:[%s2 + $0x18] sm:$0xff]
  %v409 = vld [vmem:[%s3] sm:$0xff]
  %v410 = vld [vmem:[%s3 + $0x8] sm:$0xff]
  %v411 = vld [vmem:[%s3 + $0x10] sm:$0xff]
  %v412 = vld [vmem:[%s3 + $0x18] sm:$0xff]
  %414 = vset.pattern.permute.xlu0 0
  %415 = vperm.xlu0 %414, %v405
  %v416 = vpop.permute.xlu0 %415
  %419 = vset.pattern.permute.xlu0 0
  %420 = vperm.xlu0 %419, %v406
  %v421 = vpop.permute.xlu0 %420
  %424 = vset.pattern.permute.xlu0 0
  %425 = vperm.xlu0 %424, %v407
  %v426 = vpop.permute.xlu0 %425
  %429 = vset.pattern.permute.xlu0 0
  %430 = vperm.xlu0 %429, %v408
  %v431 = vpop.permute.xlu0 %430
  %v433 = vmul.f32 %v244, %v416
  %v434 = vmul.f32 %v245, %v416
  %v435 = vmul.f32 %v246, %v416
  %v436 = vmul.f32 %v247, %v416
  %v437 = vmul.f32 %v248, %v421
  %v438 = vmul.f32 %v249, %v421
  %v439 = vmul.f32 %v250, %v421
  %v440 = vmul.f32 %v251, %v421
  %v441 = vmul.f32 %v252, %v426
  %v442 = vmul.f32 %v253, %v426
  %v443 = vmul.f32 %v254, %v426
  %v444 = vmul.f32 %v255, %v426
  %v445 = vmul.f32 %v256, %v431
  %v446 = vmul.f32 %v257, %v431
  %v447 = vmul.f32 %v258, %v431
  %v448 = vmul.f32 %v259, %v431
  %450 = vset.pattern.permute.xlu0 0
  %451 = vperm.xlu0 %450, %v409
  %v452 = vpop.permute.xlu0 %451
  %455 = vset.pattern.permute.xlu0 0
  %456 = vperm.xlu0 %455, %v410
  %v457 = vpop.permute.xlu0 %456
  %460 = vset.pattern.permute.xlu0 0
  %461 = vperm.xlu0 %460, %v411
  %v462 = vpop.permute.xlu0 %461
  %465 = vset.pattern.permute.xlu0 0
  %466 = vperm.xlu0 %465, %v412
  %v467 = vpop.permute.xlu0 %466
  %v469 = vadd.f32 %v433, %v452
  %v470 = vadd.f32 %v434, %v452
  %v471 = vadd.f32 %v435, %v452
  %v472 = vadd.f32 %v436, %v452
  %v473 = vadd.f32 %v437, %v457
  %v474 = vadd.f32 %v438, %v457
  %v475 = vadd.f32 %v439, %v457
  %v476 = vadd.f32 %v440, %v457
  %v477 = vadd.f32 %v441, %v462
  %v478 = vadd.f32 %v442, %v462
  %v479 = vadd.f32 %v443, %v462
  %v480 = vadd.f32 %v444, %v462
  %v481 = vadd.f32 %v445, %v467
  %v482 = vadd.f32 %v446, %v467
  %v483 = vadd.f32 %v447, %v467
  %v484 = vadd.f32 %v448, %v467
  %v485 = vmax.f32 %v469, 0.0
  %v486 = vmax.f32 %v470, 0.0
  %v487 = vmax.f32 %v471, 0.0
  %v488 = vmax.f32 %v472, 0.0
  %v489 = vmax.f32 %v473, 0.0
  %v490 = vmax.f32 %v474, 0.0
  %v491 = vmax.f32 %v475, 0.0
  %v492 = vmax.f32 %v476, 0.0
  %v493 = vmax.f32 %v477, 0.0
  %v494 = vmax.f32 %v478, 0.0
  %v495 = vmax.f32 %v479, 0.0
  %v496 = vmax.f32 %v480, 0.0
  %v497 = vmax.f32 %v481, 0.0
  %v498 = vmax.f32 %v482, 0.0
  %v499 = vmax.f32 %v483, 0.0
  %v500 = vmax.f32 %v484, 0.0
  %v501 = vmul.f32 %v389, %v416
  %v502 = vmul.f32 %v390, %v416
  %v503 = vmul.f32 %v391, %v416
  %v504 = vmul.f32 %v392, %v416
  %v505 = vmul.f32 %v393, %v421
  %v506 = vmul.f32 %v394, %v421
  %v507 = vmul.f32 %v395, %v421
  %v508 = vmul.f32 %v396, %v421
  %v509 = vmul.f32 %v397, %v426
  %v510 = vmul.f32 %v398, %v426
  %v511 = vmul.f32 %v399, %v426
  %v512 = vmul.f32 %v400, %v426
  %v513 = vmul.f32 %v401, %v431
  %v514 = vmul.f32 %v402, %v431
  %v515 = vmul.f32 %v403, %v431
  %v516 = vmul.f32 %v404, %v431
  %v517 = vadd.f32 %v501, %v452
  %v518 = vadd.f32 %v502, %v452
  %v519 = vadd.f32 %v503, %v452
  %v520 = vadd.f32 %v504, %v452
  %v521 = vadd.f32 %v505, %v457
  %v522 = vadd.f32 %v506, %v457
  %v523 = vadd.f32 %v507, %v457
  %v524 = vadd.f32 %v508, %v457
  %v525 = vadd.f32 %v509, %v462
  %v526 = vadd.f32 %v510, %v462
  %v527 = vadd.f32 %v511, %v462
  %v528 = vadd.f32 %v512, %v462
  %v529 = vadd.f32 %v513, %v467
  %v530 = vadd.f32 %v514, %v467
  %v531 = vadd.f32 %v515, %v467
  %v532 = vadd.f32 %v516, %v467
  %v533 = vmax.f32 %v517, 0.0
  %v534 = vmax.f32 %v518, 0.0
  %v535 = vmax.f32 %v519, 0.0
  %v536 = vmax.f32 %v520, 0.0
  %v537 = vmax.f32 %v521, 0.0
  %v538 = vmax.f32 %v522, 0.0
  %v539 = vmax.f32 %v523, 0.0
  %v540 = vmax.f32 %v524, 0.0
  %v541 = vmax.f32 %v525, 0.0
  %v542 = vmax.f32 %v526, 0.0
  %v543 = vmax.f32 %v527, 0.0
  %v544 = vmax.f32 %v528, 0.0
  %v545 = vmax.f32 %v529, 0.0
  %v546 = vmax.f32 %v530, 0.0
  %v547 = vmax.f32 %v531, 0.0
  %v548 = vmax.f32 %v532, 0.0
  %565 = vrot.lane.b32.xlu0 %v485, 127
  %v566 = vpop.permute.xlu0 %565
  %567 = vrot.lane.b32.xlu0 %v486, 127
  %v568 = vpop.permute.xlu0 %567
  %569 = vrot.lane.b32.xlu0 %v487, 127
  %v570 = vpop.permute.xlu0 %569
  %571 = vrot.lane.b32.xlu0 %v488, 127
  %v572 = vpop.permute.xlu0 %571
  %573 = vrot.lane.b32.xlu0 %v489, 127
  %v574 = vpop.permute.xlu0 %573
  %575 = vrot.lane.b32.xlu0 %v490, 127
  %v576 = vpop.permute.xlu0 %575
  %577 = vrot.lane.b32.xlu0 %v491, 127
  %v578 = vpop.permute.xlu0 %577
  %579 = vrot.lane.b32.xlu0 %v492, 127
  %v580 = vpop.permute.xlu0 %579
  %581 = vrot.lane.b32.xlu0 %v493, 127
  %v582 = vpop.permute.xlu0 %581
  %583 = vrot.lane.b32.xlu0 %v494, 127
  %v584 = vpop.permute.xlu0 %583
  %585 = vrot.lane.b32.xlu0 %v495, 127
  %v586 = vpop.permute.xlu0 %585
  %587 = vrot.lane.b32.xlu0 %v496, 127
  %v588 = vpop.permute.xlu0 %587
  %589 = vrot.lane.b32.xlu0 %v497, 127
  %v590 = vpop.permute.xlu0 %589
  %591 = vrot.lane.b32.xlu0 %v498, 127
  %v592 = vpop.permute.xlu0 %591
  %593 = vrot.lane.b32.xlu0 %v499, 127
  %v594 = vpop.permute.xlu0 %593
  %595 = vrot.lane.b32.xlu0 %v500, 127
  %v596 = vpop.permute.xlu0 %595
  %v597 = vsel %vm360, %v566, %v568
  %v598 = vsel %vm360, %v568, %v570
  %v599 = vsel %vm360, %v570, %v572
  %v600 = vsel %vm360, %v574, %v576
  %v601 = vsel %vm360, %v576, %v578
  %v602 = vsel %vm360, %v578, %v580
  %v603 = vsel %vm360, %v582, %v584
  %v604 = vsel %vm360, %v584, %v586
  %v605 = vsel %vm360, %v586, %v588
  %v606 = vsel %vm360, %v590, %v592
  %v607 = vsel %vm360, %v592, %v594
  %v608 = vsel %vm360, %v594, %v596
  %v625 = vsel %vm360, %v572, 0.0
  %v626 = vsel %vm360, %v580, 0.0
  %v627 = vsel %vm360, %v588, 0.0
  %v628 = vsel %vm360, %v596, 0.0
  %645 = vrot.lane.b32.xlu0 %v533, 127
  %v646 = vpop.permute.xlu0 %645
  %647 = vrot.lane.b32.xlu0 %v534, 127
  %v648 = vpop.permute.xlu0 %647
  %649 = vrot.lane.b32.xlu0 %v535, 127
  %v650 = vpop.permute.xlu0 %649
  %651 = vrot.lane.b32.xlu0 %v536, 127
  %v652 = vpop.permute.xlu0 %651
  %653 = vrot.lane.b32.xlu0 %v537, 127
  %v654 = vpop.permute.xlu0 %653
  %655 = vrot.lane.b32.xlu0 %v538, 127
  %v656 = vpop.permute.xlu0 %655
  %657 = vrot.lane.b32.xlu0 %v539, 127
  %v658 = vpop.permute.xlu0 %657
  %659 = vrot.lane.b32.xlu0 %v540, 127
  %v660 = vpop.permute.xlu0 %659
  %661 = vrot.lane.b32.xlu0 %v541, 127
  %v662 = vpop.permute.xlu0 %661
  %663 = vrot.lane.b32.xlu0 %v542, 127
  %v664 = vpop.permute.xlu0 %663
  %665 = vrot.lane.b32.xlu0 %v543, 127
  %v666 = vpop.permute.xlu0 %665
  %667 = vrot.lane.b32.xlu0 %v544, 127
  %v668 = vpop.permute.xlu0 %667
  %669 = vrot.lane.b32.xlu0 %v545, 127
  %v670 = vpop.permute.xlu0 %669
  %671 = vrot.lane.b32.xlu0 %v546, 127
  %v672 = vpop.permute.xlu0 %671
  %673 = vrot.lane.b32.xlu0 %v547, 127
  %v674 = vpop.permute.xlu0 %673
  %675 = vrot.lane.b32.xlu0 %v548, 127
  %v676 = vpop.permute.xlu0 %675
  %v677 = vsel %vm360, %v646, %v648
  %v678 = vsel %vm360, %v648, %v650
  %v679 = vsel %vm360, %v650, %v652
  %v680 = vsel %vm360, %v654, %v656
  %v681 = vsel %vm360, %v656, %v658
  %v682 = vsel %vm360, %v658, %v660
  %v683 = vsel %vm360, %v662, %v664
  %v684 = vsel %vm360, %v664, %v666
  %v685 = vsel %vm360, %v666, %v668
  %v686 = vsel %vm360, %v670, %v672
  %v687 = vsel %vm360, %v672, %v674
  %v688 = vsel %vm360, %v674, %v676
  %v705 = vsel %vm360, %v652, 0.0
  %v706 = vsel %vm360, %v660, 0.0
  %v707 = vsel %vm360, %v668, 0.0
  %v708 = vsel %vm360, %v676, 0.0
  %709 = vrot.lane.b32.xlu0 %v485, 126
  %v710 = vpop.permute.xlu0 %709
  %711 = vrot.lane.b32.xlu0 %v486, 126
  %v712 = vpop.permute.xlu0 %711
  %713 = vrot.lane.b32.xlu0 %v487, 126
  %v714 = vpop.permute.xlu0 %713
  %715 = vrot.lane.b32.xlu0 %v488, 126
  %v716 = vpop.permute.xlu0 %715
  %717 = vrot.lane.b32.xlu0 %v489, 126
  %v718 = vpop.permute.xlu0 %717
  %719 = vrot.lane.b32.xlu0 %v490, 126
  %v720 = vpop.permute.xlu0 %719
  %721 = vrot.lane.b32.xlu0 %v491, 126
  %v722 = vpop.permute.xlu0 %721
  %723 = vrot.lane.b32.xlu0 %v492, 126
  %v724 = vpop.permute.xlu0 %723
  %725 = vrot.lane.b32.xlu0 %v493, 126
  %v726 = vpop.permute.xlu0 %725
  %727 = vrot.lane.b32.xlu0 %v494, 126
  %v728 = vpop.permute.xlu0 %727
  %729 = vrot.lane.b32.xlu0 %v495, 126
  %v730 = vpop.permute.xlu0 %729
  %731 = vrot.lane.b32.xlu0 %v496, 126
  %v732 = vpop.permute.xlu0 %731
  %733 = vrot.lane.b32.xlu0 %v497, 126
  %v734 = vpop.permute.xlu0 %733
  %735 = vrot.lane.b32.xlu0 %v498, 126
  %v736 = vpop.permute.xlu0 %735
  %737 = vrot.lane.b32.xlu0 %v499, 126
  %v738 = vpop.permute.xlu0 %737
  %739 = vrot.lane.b32.xlu0 %v500, 126
  %v740 = vpop.permute.xlu0 %739
  %vm741 = vcmask 1031168
  %v742 = vsel %vm741, %v710, %v712
  %v743 = vsel %vm741, %v712, %v714
  %v744 = vsel %vm741, %v714, %v716
  %v745 = vsel %vm741, %v718, %v720
  %v746 = vsel %vm741, %v720, %v722
  %v747 = vsel %vm741, %v722, %v724
  %v748 = vsel %vm741, %v726, %v728
  %v749 = vsel %vm741, %v728, %v730
  %v750 = vsel %vm741, %v730, %v732
  %v751 = vsel %vm741, %v734, %v736
  %v752 = vsel %vm741, %v736, %v738
  %v753 = vsel %vm741, %v738, %v740
  %v770 = vsel %vm741, %v716, 0.0
  %v771 = vsel %vm741, %v724, 0.0
  %v772 = vsel %vm741, %v732, 0.0
  %v773 = vsel %vm741, %v740, 0.0
  %774 = vrot.lane.b32.xlu0 %v533, 126
  %v775 = vpop.permute.xlu0 %774
  %776 = vrot.lane.b32.xlu0 %v534, 126
  %v777 = vpop.permute.xlu0 %776
  %778 = vrot.lane.b32.xlu0 %v535, 126
  %v779 = vpop.permute.xlu0 %778
  %780 = vrot.lane.b32.xlu0 %v536, 126
  %v781 = vpop.permute.xlu0 %780
  %782 = vrot.lane.b32.xlu0 %v537, 126
  %v783 = vpop.permute.xlu0 %782
  %784 = vrot.lane.b32.xlu0 %v538, 126
  %v785 = vpop.permute.xlu0 %784
  %786 = vrot.lane.b32.xlu0 %v539, 126
  %v787 = vpop.permute.xlu0 %786
  %788 = vrot.lane.b32.xlu0 %v540, 126
  %v789 = vpop.permute.xlu0 %788
  %790 = vrot.lane.b32.xlu0 %v541, 126
  %v791 = vpop.permute.xlu0 %790
  %792 = vrot.lane.b32.xlu0 %v542, 126
  %v793 = vpop.permute.xlu0 %792
  %794 = vrot.lane.b32.xlu0 %v543, 126
  %v795 = vpop.permute.xlu0 %794
  %796 = vrot.lane.b32.xlu0 %v544, 126
  %v797 = vpop.permute.xlu0 %796
  %798 = vrot.lane.b32.xlu0 %v545, 126
  %v799 = vpop.permute.xlu0 %798
  %800 = vrot.lane.b32.xlu0 %v546, 126
  %v801 = vpop.permute.xlu0 %800
  %802 = vrot.lane.b32.xlu0 %v547, 126
  %v803 = vpop.permute.xlu0 %802
  %804 = vrot.lane.b32.xlu0 %v548, 126
  %v805 = vpop.permute.xlu0 %804
  %v806 = vsel %vm741, %v775, %v777
  %v807 = vsel %vm741, %v777, %v779
  %v808 = vsel %vm741, %v779, %v781
  %v809 = vsel %vm741, %v783, %v785
  %v810 = vsel %vm741, %v785, %v787
  %v811 = vsel %vm741, %v787, %v789
  %v812 = vsel %vm741, %v791, %v793
  %v813 = vsel %vm741, %v793, %v795
  %v814 = vsel %vm741, %v795, %v797
  %v815 = vsel %vm741, %v799, %v801
  %v816 = vsel %vm741, %v801, %v803
  %v817 = vsel %vm741, %v803, %v805
  %v834 = vsel %vm741, %v781, 0.0
  %v835 = vsel %vm741, %v789, 0.0
  %v836 = vsel %vm741, %v797, 0.0
  %v837 = vsel %vm741, %v805, 0.0
  %v838 = vld [vmem:[%s4] sm:$0xff]
  %v839 = vld [vmem:[%s4 + $0x8] sm:$0xff]
  %v840 = vld [vmem:[%s4 + $0x10] sm:$0xff]
  %v841 = vld [vmem:[%s4 + $0x18] sm:$0xff]
  %v842 = vld [vmem:[%s4 + $0x20] sm:$0xff]
  %v843 = vld [vmem:[%s4 + $0x28] sm:$0xff]
  %v844 = vld [vmem:[%s4 + $0x30] sm:$0xff]
  %v845 = vld [vmem:[%s4 + $0x38] sm:$0xff]
  %vm846 = vcmask 261120
  %v848 = vsel %vm846, %v839, 0
  %v851 = vsel %vm846, %v841, 0
  %v854 = vsel %vm846, %v843, 0
  %v857 = vsel %vm846, %v845, 0
  %859 = vmatpush.msra.mxu0 %v686
  %860 = vmatpush.msra.mxu0 %v683
  %861 = vmatpush.msra.mxu0 %v680
  %862 = vmatpush.msra.mxu0 %v677
  %863 = vmatpush.msra.mxu0 %v606
  %864 = vmatpush.msra.mxu0 %v603
  %865 = vmatpush.msra.mxu0 %v600
  %866 = vmatpush.msra.mxu0 %v597
  %867 = vmatpush.msra.mxu0 %v545
  %868 = vmatpush.msra.mxu0 %v541
  %869 = vmatpush.msra.mxu0 %v537
  %870 = vmatpush.msra.mxu0 %v533
  %871 = vmatpush.msra.mxu0 %v497
  %872 = vmatpush.msra.mxu0 %v493
  %873 = vmatpush.msra.mxu0 %v489
  %874 = vmatpush.msra.mxu0 %v485
  %875 = vmatmul.f32.gmra.mxu0 %v838
  %v876 = vpop.f32.mrf.mxu0
  %v877 = vadd.f32 0.0, %v876
  %878 = vmatmul.f32.gmra.mxu0 %v840
  %v879 = vpop.f32.mrf.mxu0
  %v880 = vadd.f32 0.0, %v879
  %881 = vmatmul.f32.gmra.mxu0 %v842
  %v882 = vpop.f32.mrf.mxu0
  %v883 = vadd.f32 0.0, %v882
  %884 = vmatmul.f32.gmra.mxu0 %v844
  %v885 = vpop.f32.mrf.mxu0
  %v886 = vadd.f32 0.0, %v885
  %887 = vdwg.mxu0
  %888 = vmatpush.msra.mxu0 0.0
  %889 = vmatpush.msra.mxu0 0.0
  %890 = vmatpush.msra.mxu0 0.0
  %891 = vmatpush.msra.mxu0 0.0
  %892 = vmatpush.msra.mxu0 0.0
  %893 = vmatpush.msra.mxu0 0.0
  %894 = vmatpush.msra.mxu0 0.0
  %895 = vmatpush.msra.mxu0 0.0
  %896 = vmatpush.msra.mxu0 0.0
  %897 = vmatpush.msra.mxu0 0.0
  %898 = vmatpush.msra.mxu0 0.0
  %899 = vmatpush.msra.mxu0 0.0
  %900 = vmatpush.msra.mxu0 %v751
  %901 = vmatpush.msra.mxu0 %v748
  %902 = vmatpush.msra.mxu0 %v745
  %903 = vmatpush.msra.mxu0 %v742
  %904 = vmatmul.f32.gmra.mxu0 %v848
  %v905 = vpop.f32.mrf.mxu0
  %v906 = vadd.f32 %v877, %v905
  %907 = vmatmul.f32.gmra.mxu0 %v851
  %v908 = vpop.f32.mrf.mxu0
  %v909 = vadd.f32 %v880, %v908
  %910 = vmatmul.f32.gmra.mxu0 %v854
  %v911 = vpop.f32.mrf.mxu0
  %v912 = vadd.f32 %v883, %v911
  %913 = vmatmul.f32.gmra.mxu0 %v857
  %v914 = vpop.f32.mrf.mxu0
  %v915 = vadd.f32 %v886, %v914
  %916 = vdwg.mxu0
  %917 = vmatpush.msra.mxu0 %v687
  %918 = vmatpush.msra.mxu0 %v684
  %919 = vmatpush.msra.mxu0 %v681
  %920 = vmatpush.msra.mxu0 %v678
  %921 = vmatpush.msra.mxu0 %v607
  %922 = vmatpush.msra.mxu0 %v604
  %923 = vmatpush.msra.mxu0 %v601
  %924 = vmatpush.msra.mxu0 %v598
  %925 = vmatpush.msra.mxu0 %v546
  %926 = vmatpush.msra.mxu0 %v542
  %927 = vmatpush.msra.mxu0 %v538
  %928 = vmatpush.msra.mxu0 %v534
  %929 = vmatpush.msra.mxu0 %v498
  %930 = vmatpush.msra.mxu0 %v494
  %931 = vmatpush.msra.mxu0 %v490
  %932 = vmatpush.msra.mxu0 %v486
  %933 = vmatmul.f32.gmra.mxu0 %v838
  %v934 = vpop.f32.mrf.mxu0
  %v935 = vadd.f32 0.0, %v934
  %936 = vmatmul.f32.gmra.mxu0 %v840
  %v937 = vpop.f32.mrf.mxu0
  %v938 = vadd.f32 0.0, %v937
  %939 = vmatmul.f32.gmra.mxu0 %v842
  %v940 = vpop.f32.mrf.mxu0
  %v941 = vadd.f32 0.0, %v940
  %942 = vmatmul.f32.gmra.mxu0 %v844
  %v943 = vpop.f32.mrf.mxu0
  %v944 = vadd.f32 0.0, %v943
  %945 = vdwg.mxu0
  %946 = vmatpush.msra.mxu0 0.0
  %947 = vmatpush.msra.mxu0 0.0
  %948 = vmatpush.msra.mxu0 0.0
  %949 = vmatpush.msra.mxu0 0.0
  %950 = vmatpush.msra.mxu0 0.0
  %951 = vmatpush.msra.mxu0 0.0
  %952 = vmatpush.msra.mxu0 0.0
  %953 = vmatpush.msra.mxu0 0.0
  %954 = vmatpush.msra.mxu0 0.0
  %955 = vmatpush.msra.mxu0 0.0
  %956 = vmatpush.msra.mxu0 0.0
  %957 = vmatpush.msra.mxu0 0.0
  %958 = vmatpush.msra.mxu0 %v752
  %959 = vmatpush.msra.mxu0 %v749
  %960 = vmatpush.msra.mxu0 %v746
  %961 = vmatpush.msra.mxu0 %v743
  %962 = vmatmul.f32.gmra.mxu0 %v848
  %v963 = vpop.f32.mrf.mxu0
  %v964 = vadd.f32 %v935, %v963
  %965 = vmatmul.f32.gmra.mxu0 %v851
  %v966 = vpop.f32.mrf.mxu0
  %v967 = vadd.f32 %v938, %v966
  %968 = vmatmul.f32.gmra.mxu0 %v854
  %v969 = vpop.f32.mrf.mxu0
  %v970 = vadd.f32 %v941, %v969
  %971 = vmatmul.f32.gmra.mxu0 %v857
  %v972 = vpop.f32.mrf.mxu0
  %v973 = vadd.f32 %v944, %v972
  %974 = vdwg.mxu0
  %975 = vmatpush.msra.mxu0 %v688
  %976 = vmatpush.msra.mxu0 %v685
  %977 = vmatpush.msra.mxu0 %v682
  %978 = vmatpush.msra.mxu0 %v679
  %979 = vmatpush.msra.mxu0 %v608
  %980 = vmatpush.msra.mxu0 %v605
  %981 = vmatpush.msra.mxu0 %v602
  %982 = vmatpush.msra.mxu0 %v599
  %983 = vmatpush.msra.mxu0 %v547
  %984 = vmatpush.msra.mxu0 %v543
  %985 = vmatpush.msra.mxu0 %v539
  %986 = vmatpush.msra.mxu0 %v535
  %987 = vmatpush.msra.mxu0 %v499
  %988 = vmatpush.msra.mxu0 %v495
  %989 = vmatpush.msra.mxu0 %v491
  %990 = vmatpush.msra.mxu0 %v487
  %991 = vmatmul.f32.gmra.mxu0 %v838
  %v992 = vpop.f32.mrf.mxu0
  %v993 = vadd.f32 0.0, %v992
  %994 = vmatmul.f32.gmra.mxu0 %v840
  %v995 = vpop.f32.mrf.mxu0
  %v996 = vadd.f32 0.0, %v995
  %997 = vmatmul.f32.gmra.mxu0 %v842
  %v998 = vpop.f32.mrf.mxu0
  %v999 = vadd.f32 0.0, %v998
  %1000 = vmatmul.f32.gmra.mxu0 %v844
  %v1001 = vpop.f32.mrf.mxu0
  %v1002 = vadd.f32 0.0, %v1001
  %1003 = vdwg.mxu0
  %1004 = vmatpush.msra.mxu0 0.0
  %1005 = vmatpush.msra.mxu0 0.0
  %1006 = vmatpush.msra.mxu0 0.0
  %1007 = vmatpush.msra.mxu0 0.0
  %1008 = vmatpush.msra.mxu0 0.0
  %1009 = vmatpush.msra.mxu0 0.0
  %1010 = vmatpush.msra.mxu0 0.0
  %1011 = vmatpush.msra.mxu0 0.0
  %1012 = vmatpush.msra.mxu0 0.0
  %1013 = vmatpush.msra.mxu0 0.0
  %1014 = vmatpush.msra.mxu0 0.0
  %1015 = vmatpush.msra.mxu0 0.0
  %1016 = vmatpush.msra.mxu0 %v753
  %1017 = vmatpush.msra.mxu0 %v750
  %1018 = vmatpush.msra.mxu0 %v747
  %1019 = vmatpush.msra.mxu0 %v744
  %1020 = vmatmul.f32.gmra.mxu0 %v848
  %v1021 = vpop.f32.mrf.mxu0
  %v1022 = vadd.f32 %v993, %v1021
  %1023 = vmatmul.f32.gmra.mxu0 %v851
  %v1024 = vpop.f32.mrf.mxu0
  %v1025 = vadd.f32 %v996, %v1024
  %1026 = vmatmul.f32.gmra.mxu0 %v854
  %v1027 = vpop.f32.mrf.mxu0
  %v1028 = vadd.f32 %v999, %v1027
  %1029 = vmatmul.f32.gmra.mxu0 %v857
  %v1030 = vpop.f32.mrf.mxu0
  %v1031 = vadd.f32 %v1002, %v1030
  %1032 = vdwg.mxu0
  %1033 = vmatpush.msra.mxu0 %v708
  %1034 = vmatpush.msra.mxu0 %v707
  %1035 = vmatpush.msra.mxu0 %v706
  %1036 = vmatpush.msra.mxu0 %v705
  %1037 = vmatpush.msra.mxu0 %v628
  %1038 = vmatpush.msra.mxu0 %v627
  %1039 = vmatpush.msra.mxu0 %v626
  %1040 = vmatpush.msra.mxu0 %v625
  %1041 = vmatpush.msra.mxu0 %v548
  %1042 = vmatpush.msra.mxu0 %v544
  %1043 = vmatpush.msra.mxu0 %v540
  %1044 = vmatpush.msra.mxu0 %v536
  %1045 = vmatpush.msra.mxu0 %v500
  %1046 = vmatpush.msra.mxu0 %v496
  %1047 = vmatpush.msra.mxu0 %v492
  %1048 = vmatpush.msra.mxu0 %v488
  %1049 = vmatmul.f32.gmra.mxu0 %v838
  %v1050 = vpop.f32.mrf.mxu0
  %v1051 = vadd.f32 0.0, %v1050
  %1052 = vmatmul.f32.gmra.mxu0 %v840
  %v1053 = vpop.f32.mrf.mxu0
  %v1054 = vadd.f32 0.0, %v1053
  %1055 = vmatmul.f32.gmra.mxu0 %v842
  %v1056 = vpop.f32.mrf.mxu0
  %v1057 = vadd.f32 0.0, %v1056
  %1058 = vmatmul.f32.gmra.mxu0 %v844
  %v1059 = vpop.f32.mrf.mxu0
  %v1060 = vadd.f32 0.0, %v1059
  %1061 = vdwg.mxu0
  %1062 = vmatpush.msra.mxu0 0.0
  %1063 = vmatpush.msra.mxu0 0.0
  %1064 = vmatpush.msra.mxu0 0.0
  %1065 = vmatpush.msra.mxu0 0.0
  %1066 = vmatpush.msra.mxu0 0.0
  %1067 = vmatpush.msra.mxu0 0.0
  %1068 = vmatpush.msra.mxu0 0.0
  %1069 = vmatpush.msra.mxu0 0.0
  %1070 = vmatpush.msra.mxu0 0.0
  %1071 = vmatpush.msra.mxu0 0.0
  %1072 = vmatpush.msra.mxu0 0.0
  %1073 = vmatpush.msra.mxu0 0.0
  %1074 = vmatpush.msra.mxu0 %v773
  %1075 = vmatpush.msra.mxu0 %v772
  %1076 = vmatpush.msra.mxu0 %v771
  %1077 = vmatpush.msra.mxu0 %v770
  %1078 = vmatmul.f32.gmra.mxu0 %v848
  %v1079 = vpop.f32.mrf.mxu0
  %v1080 = vadd.f32 %v1051, %v1079
  %1081 = vmatmul.f32.gmra.mxu0 %v851
  %v1082 = vpop.f32.mrf.mxu0
  %v1083 = vadd.f32 %v1054, %v1082
  %1084 = vmatmul.f32.gmra.mxu0 %v854
  %v1085 = vpop.f32.mrf.mxu0
  %v1086 = vadd.f32 %v1057, %v1085
  %1087 = vmatmul.f32.gmra.mxu0 %v857
  %v1088 = vpop.f32.mrf.mxu0
  %v1089 = vadd.f32 %v1060, %v1088
  %1090 = vdwg.mxu0
  %1091 = vmatpush.msra.mxu0 %v751
  %1092 = vmatpush.msra.mxu0 %v748
  %1093 = vmatpush.msra.mxu0 %v745
  %1094 = vmatpush.msra.mxu0 %v742
  %1095 = vmatpush.msra.mxu0 %v686
  %1096 = vmatpush.msra.mxu0 %v683
  %1097 = vmatpush.msra.mxu0 %v680
  %1098 = vmatpush.msra.mxu0 %v677
  %1099 = vmatpush.msra.mxu0 %v606
  %1100 = vmatpush.msra.mxu0 %v603
  %1101 = vmatpush.msra.mxu0 %v600
  %1102 = vmatpush.msra.mxu0 %v597
  %1103 = vmatpush.msra.mxu0 %v545
  %1104 = vmatpush.msra.mxu0 %v541
  %1105 = vmatpush.msra.mxu0 %v537
  %1106 = vmatpush.msra.mxu0 %v533
  %1107 = vmatmul.f32.gmra.mxu0 %v838
  %v1108 = vpop.f32.mrf.mxu0
  %v1109 = vadd.f32 0.0, %v1108
  %1110 = vmatmul.f32.gmra.mxu0 %v840
  %v1111 = vpop.f32.mrf.mxu0
  %v1112 = vadd.f32 0.0, %v1111
  %1113 = vmatmul.f32.gmra.mxu0 %v842
  %v1114 = vpop.f32.mrf.mxu0
  %v1115 = vadd.f32 0.0, %v1114
  %1116 = vmatmul.f32.gmra.mxu0 %v844
  %v1117 = vpop.f32.mrf.mxu0
  %v1118 = vadd.f32 0.0, %v1117
  %1119 = vdwg.mxu0
  %1120 = vmatpush.msra.mxu0 0.0
  %1121 = vmatpush.msra.mxu0 0.0
  %1122 = vmatpush.msra.mxu0 0.0
  %1123 = vmatpush.msra.mxu0 0.0
  %1124 = vmatpush.msra.mxu0 0.0
  %1125 = vmatpush.msra.mxu0 0.0
  %1126 = vmatpush.msra.mxu0 0.0
  %1127 = vmatpush.msra.mxu0 0.0
  %1128 = vmatpush.msra.mxu0 0.0
  %1129 = vmatpush.msra.mxu0 0.0
  %1130 = vmatpush.msra.mxu0 0.0
  %1131 = vmatpush.msra.mxu0 0.0
  %1132 = vmatpush.msra.mxu0 %v815
  %1133 = vmatpush.msra.mxu0 %v812
  %1134 = vmatpush.msra.mxu0 %v809
  %1135 = vmatpush.msra.mxu0 %v806
  %1136 = vmatmul.f32.gmra.mxu0 %v848
  %v1137 = vpop.f32.mrf.mxu0
  %v1138 = vadd.f32 %v1109, %v1137
  %1139 = vmatmul.f32.gmra.mxu0 %v851
  %v1140 = vpop.f32.mrf.mxu0
  %v1141 = vadd.f32 %v1112, %v1140
  %1142 = vmatmul.f32.gmra.mxu0 %v854
  %v1143 = vpop.f32.mrf.mxu0
  %v1144 = vadd.f32 %v1115, %v1143
  %1145 = vmatmul.f32.gmra.mxu0 %v857
  %v1146 = vpop.f32.mrf.mxu0
  %v1147 = vadd.f32 %v1118, %v1146
  %1148 = vdwg.mxu0
  %1149 = vmatpush.msra.mxu0 %v752
  %1150 = vmatpush.msra.mxu0 %v749
  %1151 = vmatpush.msra.mxu0 %v746
  %1152 = vmatpush.msra.mxu0 %v743
  %1153 = vmatpush.msra.mxu0 %v687
  %1154 = vmatpush.msra.mxu0 %v684
  %1155 = vmatpush.msra.mxu0 %v681
  %1156 = vmatpush.msra.mxu0 %v678
  %1157 = vmatpush.msra.mxu0 %v607
  %1158 = vmatpush.msra.mxu0 %v604
  %1159 = vmatpush.msra.mxu0 %v601
  %1160 = vmatpush.msra.mxu0 %v598
  %1161 = vmatpush.msra.mxu0 %v546
  %1162 = vmatpush.msra.mxu0 %v542
  %1163 = vmatpush.msra.mxu0 %v538
  %1164 = vmatpush.msra.mxu0 %v534
  %1165 = vmatmul.f32.gmra.mxu0 %v838
  %v1166 = vpop.f32.mrf.mxu0
  %v1167 = vadd.f32 0.0, %v1166
  %1168 = vmatmul.f32.gmra.mxu0 %v840
  %v1169 = vpop.f32.mrf.mxu0
  %v1170 = vadd.f32 0.0, %v1169
  %1171 = vmatmul.f32.gmra.mxu0 %v842
  %v1172 = vpop.f32.mrf.mxu0
  %v1173 = vadd.f32 0.0, %v1172
  %1174 = vmatmul.f32.gmra.mxu0 %v844
  %v1175 = vpop.f32.mrf.mxu0
  %v1176 = vadd.f32 0.0, %v1175
  %1177 = vdwg.mxu0
  %1178 = vmatpush.msra.mxu0 0.0
  %1179 = vmatpush.msra.mxu0 0.0
  %1180 = vmatpush.msra.mxu0 0.0
  %1181 = vmatpush.msra.mxu0 0.0
  %1182 = vmatpush.msra.mxu0 0.0
  %1183 = vmatpush.msra.mxu0 0.0
  %1184 = vmatpush.msra.mxu0 0.0
  %1185 = vmatpush.msra.mxu0 0.0
  %1186 = vmatpush.msra.mxu0 0.0
  %1187 = vmatpush.msra.mxu0 0.0
  %1188 = vmatpush.msra.mxu0 0.0
  %1189 = vmatpush.msra.mxu0 0.0
  %1190 = vmatpush.msra.mxu0 %v816
  %1191 = vmatpush.msra.mxu0 %v813
  %1192 = vmatpush.msra.mxu0 %v810
  %1193 = vmatpush.msra.mxu0 %v807
  %1194 = vmatmul.f32.gmra.mxu0 %v848
  %v1195 = vpop.f32.mrf.mxu0
  %v1196 = vadd.f32 %v1167, %v1195
  %1197 = vmatmul.f32.gmra.mxu0 %v851
  %v1198 = vpop.f32.mrf.mxu0
  %v1199 = vadd.f32 %v1170, %v1198
  %1200 = vmatmul.f32.gmra.mxu0 %v854
  %v1201 = vpop.f32.mrf.mxu0
  %v1202 = vadd.f32 %v1173, %v1201
  %1203 = vmatmul.f32.gmra.mxu0 %v857
  %v1204 = vpop.f32.mrf.mxu0
  %v1205 = vadd.f32 %v1176, %v1204
  %1206 = vdwg.mxu0
  %1207 = vmatpush.msra.mxu0 %v753
  %1208 = vmatpush.msra.mxu0 %v750
  %1209 = vmatpush.msra.mxu0 %v747
  %1210 = vmatpush.msra.mxu0 %v744
  %1211 = vmatpush.msra.mxu0 %v688
  %1212 = vmatpush.msra.mxu0 %v685
  %1213 = vmatpush.msra.mxu0 %v682
  %1214 = vmatpush.msra.mxu0 %v679
  %1215 = vmatpush.msra.mxu0 %v608
  %1216 = vmatpush.msra.mxu0 %v605
  %1217 = vmatpush.msra.mxu0 %v602
  %1218 = vmatpush.msra.mxu0 %v599
  %1219 = vmatpush.msra.mxu0 %v547
  %1220 = vmatpush.msra.mxu0 %v543
  %1221 = vmatpush.msra.mxu0 %v539
  %1222 = vmatpush.msra.mxu0 %v535
  %1223 = vmatmul.f32.gmra.mxu0 %v838
  %v1224 = vpop.f32.mrf.mxu0
  %v1225 = vadd.f32 0.0, %v1224
  %1226 = vmatmul.f32.gmra.mxu0 %v840
  %v1227 = vpop.f32.mrf.mxu0
  %v1228 = vadd.f32 0.0, %v1227
  %1229 = vmatmul.f32.gmra.mxu0 %v842
  %v1230 = vpop.f32.mrf.mxu0
  %v1231 = vadd.f32 0.0, %v1230
  %1232 = vmatmul.f32.gmra.mxu0 %v844
  %v1233 = vpop.f32.mrf.mxu0
  %v1234 = vadd.f32 0.0, %v1233
  %1235 = vdwg.mxu0
  %1236 = vmatpush.msra.mxu0 0.0
  %1237 = vmatpush.msra.mxu0 0.0
  %1238 = vmatpush.msra.mxu0 0.0
  %1239 = vmatpush.msra.mxu0 0.0
  %1240 = vmatpush.msra.mxu0 0.0
  %1241 = vmatpush.msra.mxu0 0.0
  %1242 = vmatpush.msra.mxu0 0.0
  %1243 = vmatpush.msra.mxu0 0.0
  %1244 = vmatpush.msra.mxu0 0.0
  %1245 = vmatpush.msra.mxu0 0.0
  %1246 = vmatpush.msra.mxu0 0.0
  %1247 = vmatpush.msra.mxu0 0.0
  %1248 = vmatpush.msra.mxu0 %v817
  %1249 = vmatpush.msra.mxu0 %v814
  %1250 = vmatpush.msra.mxu0 %v811
  %1251 = vmatpush.msra.mxu0 %v808
  %1252 = vmatmul.f32.gmra.mxu0 %v848
  %v1253 = vpop.f32.mrf.mxu0
  %v1254 = vadd.f32 %v1225, %v1253
  %1255 = vmatmul.f32.gmra.mxu0 %v851
  %v1256 = vpop.f32.mrf.mxu0
  %v1257 = vadd.f32 %v1228, %v1256
  %1258 = vmatmul.f32.gmra.mxu0 %v854
  %v1259 = vpop.f32.mrf.mxu0
  %v1260 = vadd.f32 %v1231, %v1259
  %1261 = vmatmul.f32.gmra.mxu0 %v857
  %v1262 = vpop.f32.mrf.mxu0
  %v1263 = vadd.f32 %v1234, %v1262
  %1264 = vdwg.mxu0
  %1265 = vmatpush.msra.mxu0 %v773
  %1266 = vmatpush.msra.mxu0 %v772
  %1267 = vmatpush.msra.mxu0 %v771
  %1268 = vmatpush.msra.mxu0 %v770
  %1269 = vmatpush.msra.mxu0 %v708
  %1270 = vmatpush.msra.mxu0 %v707
  %1271 = vmatpush.msra.mxu0 %v706
  %1272 = vmatpush.msra.mxu0 %v705
  %1273 = vmatpush.msra.mxu0 %v628
  %1274 = vmatpush.msra.mxu0 %v627
  %1275 = vmatpush.msra.mxu0 %v626
  %1276 = vmatpush.msra.mxu0 %v625
  %1277 = vmatpush.msra.mxu0 %v548
  %1278 = vmatpush.msra.mxu0 %v544
  %1279 = vmatpush.msra.mxu0 %v540
  %1280 = vmatpush.msra.mxu0 %v536
  %1281 = vmatmul.f32.gmra.mxu0 %v838
  %v1282 = vpop.f32.mrf.mxu0
  %v1283 = vadd.f32 0.0, %v1282
  %1284 = vmatmul.f32.gmra.mxu0 %v840
  %v1285 = vpop.f32.mrf.mxu0
  %v1286 = vadd.f32 0.0, %v1285
  %1287 = vmatmul.f32.gmra.mxu0 %v842
  %v1288 = vpop.f32.mrf.mxu0
  %v1289 = vadd.f32 0.0, %v1288
  %1290 = vmatmul.f32.gmra.mxu0 %v844
  %v1291 = vpop.f32.mrf.mxu0
  %v1292 = vadd.f32 0.0, %v1291
  %1293 = vdwg.mxu0
  %1294 = vmatpush.msra.mxu0 0.0
  %1295 = vmatpush.msra.mxu0 0.0
  %1296 = vmatpush.msra.mxu0 0.0
  %1297 = vmatpush.msra.mxu0 0.0
  %1298 = vmatpush.msra.mxu0 0.0
  %1299 = vmatpush.msra.mxu0 0.0
  %1300 = vmatpush.msra.mxu0 0.0
  %1301 = vmatpush.msra.mxu0 0.0
  %1302 = vmatpush.msra.mxu0 0.0
  %1303 = vmatpush.msra.mxu0 0.0
  %1304 = vmatpush.msra.mxu0 0.0
  %1305 = vmatpush.msra.mxu0 0.0
  %1306 = vmatpush.msra.mxu0 %v837
  %1307 = vmatpush.msra.mxu0 %v836
  %1308 = vmatpush.msra.mxu0 %v835
  %1309 = vmatpush.msra.mxu0 %v834
  %1310 = vmatmul.f32.gmra.mxu0 %v848
  %v1311 = vpop.f32.mrf.mxu0
  %v1312 = vadd.f32 %v1283, %v1311
  %1313 = vmatmul.f32.gmra.mxu0 %v851
  %v1314 = vpop.f32.mrf.mxu0
  %v1315 = vadd.f32 %v1286, %v1314
  %1316 = vmatmul.f32.gmra.mxu0 %v854
  %v1317 = vpop.f32.mrf.mxu0
  %v1318 = vadd.f32 %v1289, %v1317
  %1319 = vmatmul.f32.gmra.mxu0 %v857
  %v1320 = vpop.f32.mrf.mxu0
  %v1321 = vadd.f32 %v1292, %v1320
  %1322 = vdwg.mxu0
  %v1323 = vld [vmem:[%s5] sm:$0xff]
  %v1324 = vld [vmem:[%s5 + $0x8] sm:$0xff]
  %v1325 = vld [vmem:[%s5 + $0x10] sm:$0xff]
  %v1326 = vld [vmem:[%s5 + $0x18] sm:$0xff]
  %v1327 = vld [vmem:[%s6] sm:$0xff]
  %v1328 = vld [vmem:[%s6 + $0x8] sm:$0xff]
  %v1329 = vld [vmem:[%s6 + $0x10] sm:$0xff]
  %v1330 = vld [vmem:[%s6 + $0x18] sm:$0xff]
  %1332 = vset.pattern.permute.xlu0 0
  %1333 = vperm.xlu0 %1332, %v1323
  %v1334 = vpop.permute.xlu0 %1333
  %1337 = vset.pattern.permute.xlu0 0
  %1338 = vperm.xlu0 %1337, %v1324
  %v1339 = vpop.permute.xlu0 %1338
  %1342 = vset.pattern.permute.xlu0 0
  %1343 = vperm.xlu0 %1342, %v1325
  %v1344 = vpop.permute.xlu0 %1343
  %1347 = vset.pattern.permute.xlu0 0
  %1348 = vperm.xlu0 %1347, %v1326
  %v1349 = vpop.permute.xlu0 %1348
  %v1351 = vmul.f32 %v906, %v1334
  %v1352 = vmul.f32 %v964, %v1334
  %v1353 = vmul.f32 %v1022, %v1334
  %v1354 = vmul.f32 %v1080, %v1334
  %v1355 = vmul.f32 %v909, %v1339
  %v1356 = vmul.f32 %v967, %v1339
  %v1357 = vmul.f32 %v1025, %v1339
  %v1358 = vmul.f32 %v1083, %v1339
  %v1359 = vmul.f32 %v912, %v1344
  %v1360 = vmul.f32 %v970, %v1344
  %v1361 = vmul.f32 %v1028, %v1344
  %v1362 = vmul.f32 %v1086, %v1344
  %v1363 = vmul.f32 %v915, %v1349
  %v1364 = vmul.f32 %v973, %v1349
  %v1365 = vmul.f32 %v1031, %v1349
  %v1366 = vmul.f32 %v1089, %v1349
  %1368 = vset.pattern.permute.xlu0 0
  %1369 = vperm.xlu0 %1368, %v1327
  %v1370 = vpop.permute.xlu0 %1369
  %1373 = vset.pattern.permute.xlu0 0
  %1374 = vperm.xlu0 %1373, %v1328
  %v1375 = vpop.permute.xlu0 %1374
  %1378 = vset.pattern.permute.xlu0 0
  %1379 = vperm.xlu0 %1378, %v1329
  %v1380 = vpop.permute.xlu0 %1379
  %1383 = vset.pattern.permute.xlu0 0
  %1384 = vperm.xlu0 %1383, %v1330
  %v1385 = vpop.permute.xlu0 %1384
  %v1387 = vadd.f32 %v1351, %v1370
  %v1388 = vadd.f32 %v1352, %v1370
  %v1389 = vadd.f32 %v1353, %v1370
  %v1390 = vadd.f32 %v1354, %v1370
  %v1391 = vadd.f32 %v1355, %v1375
  %v1392 = vadd.f32 %v1356, %v1375
  %v1393 = vadd.f32 %v1357, %v1375
  %v1394 = vadd.f32 %v1358, %v1375
  %v1395 = vadd.f32 %v1359, %v1380
  %v1396 = vadd.f32 %v1360, %v1380
  %v1397 = vadd.f32 %v1361, %v1380
  %v1398 = vadd.f32 %v1362, %v1380
  %v1399 = vadd.f32 %v1363, %v1385
  %v1400 = vadd.f32 %v1364, %v1385
  %v1401 = vadd.f32 %v1365, %v1385
  %v1402 = vadd.f32 %v1366, %v1385
  %v1403 = vmax.f32 %v1387, 0.0
  %v1404 = vmax.f32 %v1388, 0.0
  %v1405 = vmax.f32 %v1389, 0.0
  %v1406 = vmax.f32 %v1390, 0.0
  %v1407 = vmax.f32 %v1391, 0.0
  %v1408 = vmax.f32 %v1392, 0.0
  %v1409 = vmax.f32 %v1393, 0.0
  %v1410 = vmax.f32 %v1394, 0.0
  %v1411 = vmax.f32 %v1395, 0.0
  %v1412 = vmax.f32 %v1396, 0.0
  %v1413 = vmax.f32 %v1397, 0.0
  %v1414 = vmax.f32 %v1398, 0.0
  %v1415 = vmax.f32 %v1399, 0.0
  %v1416 = vmax.f32 %v1400, 0.0
  %v1417 = vmax.f32 %v1401, 0.0
  %v1418 = vmax.f32 %v1402, 0.0
  %v1419 = vmul.f32 %v1138, %v1334
  %v1420 = vmul.f32 %v1196, %v1334
  %v1421 = vmul.f32 %v1254, %v1334
  %v1422 = vmul.f32 %v1312, %v1334
  %v1423 = vmul.f32 %v1141, %v1339
  %v1424 = vmul.f32 %v1199, %v1339
  %v1425 = vmul.f32 %v1257, %v1339
  %v1426 = vmul.f32 %v1315, %v1339
  %v1427 = vmul.f32 %v1144, %v1344
  %v1428 = vmul.f32 %v1202, %v1344
  %v1429 = vmul.f32 %v1260, %v1344
  %v1430 = vmul.f32 %v1318, %v1344
  %v1431 = vmul.f32 %v1147, %v1349
  %v1432 = vmul.f32 %v1205, %v1349
  %v1433 = vmul.f32 %v1263, %v1349
  %v1434 = vmul.f32 %v1321, %v1349
  %v1435 = vadd.f32 %v1419, %v1370
  %v1436 = vadd.f32 %v1420, %v1370
  %v1437 = vadd.f32 %v1421, %v1370
  %v1438 = vadd.f32 %v1422, %v1370
  %v1439 = vadd.f32 %v1423, %v1375
  %v1440 = vadd.f32 %v1424, %v1375
  %v1441 = vadd.f32 %v1425, %v1375
  %v1442 = vadd.f32 %v1426, %v1375
  %v1443 = vadd.f32 %v1427, %v1380
  %v1444 = vadd.f32 %v1428, %v1380
  %v1445 = vadd.f32 %v1429, %v1380
  %v1446 = vadd.f32 %v1430, %v1380
  %v1447 = vadd.f32 %v1431, %v1385
  %v1448 = vadd.f32 %v1432, %v1385
  %v1449 = vadd.f32 %v1433, %v1385
  %v1450 = vadd.f32 %v1434, %v1385
  %v1451 = vmax.f32 %v1435, 0.0
  %v1452 = vmax.f32 %v1436, 0.0
  %v1453 = vmax.f32 %v1437, 0.0
  %v1454 = vmax.f32 %v1438, 0.0
  %v1455 = vmax.f32 %v1439, 0.0
  %v1456 = vmax.f32 %v1440, 0.0
  %v1457 = vmax.f32 %v1441, 0.0
  %v1458 = vmax.f32 %v1442, 0.0
  %v1459 = vmax.f32 %v1443, 0.0
  %v1460 = vmax.f32 %v1444, 0.0
  %v1461 = vmax.f32 %v1445, 0.0
  %v1462 = vmax.f32 %v1446, 0.0
  %v1463 = vmax.f32 %v1447, 0.0
  %v1464 = vmax.f32 %v1448, 0.0
  %v1465 = vmax.f32 %v1449, 0.0
  %v1466 = vmax.f32 %v1450, 0.0
  %v1467 = vmax.f32 %v1403, %v1451
  %v1468 = vmax.f32 %v1404, %v1452
  %v1469 = vmax.f32 %v1405, %v1453
  %v1470 = vmax.f32 %v1406, %v1454
  %v1471 = vmax.f32 %v1407, %v1455
  %v1472 = vmax.f32 %v1408, %v1456
  %v1473 = vmax.f32 %v1409, %v1457
  %v1474 = vmax.f32 %v1410, %v1458
  %v1475 = vmax.f32 %v1411, %v1459
  %v1476 = vmax.f32 %v1412, %v1460
  %v1477 = vmax.f32 %v1413, %v1461
  %v1478 = vmax.f32 %v1414, %v1462
  %v1479 = vmax.f32 %v1415, %v1463
  %v1480 = vmax.f32 %v1416, %v1464
  %v1481 = vmax.f32 %v1417, %v1465
  %v1482 = vmax.f32 %v1418, %v1466
  %v1483 = vld [vmem:[%s9] sm:$0xff]
  %v1484 = vld [vmem:[%s9 + $0x8] sm:$0xff]
  %v1485 = vld [vmem:[%s9 + $0x10] sm:$0xff]
  %v1486 = vld [vmem:[%s9 + $0x18] sm:$0xff]
  %v1487 = vld [vmem:[%s10] sm:$0xff]
  %v1488 = vld [vmem:[%s10 + $0x8] sm:$0xff]
  %v1489 = vld [vmem:[%s10 + $0x10] sm:$0xff]
  %v1490 = vld [vmem:[%s10 + $0x18] sm:$0xff]
  %v1491 = vld [vmem:[%s13] sm:$0xff]
  %v1492 = vld [vmem:[%s13 + $0x8] sm:$0xff]
  %v1493 = vld [vmem:[%s13 + $0x10] sm:$0xff]
  %v1494 = vld [vmem:[%s13 + $0x18] sm:$0xff]
  %v1495 = vld [vmem:[%s14] sm:$0xff]
  %v1496 = vld [vmem:[%s14 + $0x8] sm:$0xff]
  %v1497 = vld [vmem:[%s14 + $0x10] sm:$0xff]
  %v1498 = vld [vmem:[%s14 + $0x18] sm:$0xff]
  %v1499 = vld [vmem:[%s7] sm:$0xff]
  %v1500 = vld [vmem:[%s7 + $0x8] sm:$0xff]
  %v1501 = vld [vmem:[%s7 + $0x10] sm:$0xff]
  %v1502 = vld [vmem:[%s7 + $0x18] sm:$0xff]
  %v1503 = vld [vmem:[%s7 + $0x20] sm:$0xff]
  %v1504 = vld [vmem:[%s7 + $0x28] sm:$0xff]
  %v1505 = vld [vmem:[%s7 + $0x30] sm:$0xff]
  %v1506 = vld [vmem:[%s7 + $0x38] sm:$0xff]
  %v1507 = vld [vmem:[%s7 + $0x40] sm:$0xff]
  %v1508 = vld [vmem:[%s7 + $0x48] sm:$0xff]
  %v1509 = vld [vmem:[%s7 + $0x50] sm:$0xff]
  %v1510 = vld [vmem:[%s7 + $0x58] sm:$0xff]
  %v1511 = vld [vmem:[%s7 + $0x60] sm:$0xff]
  %v1512 = vld [vmem:[%s7 + $0x68] sm:$0xff]
  %v1513 = vld [vmem:[%s7 + $0x70] sm:$0xff]
  %v1514 = vld [vmem:[%s7 + $0x78] sm:$0xff]
  %v1515 = vld [vmem:[%s7 + $0x80] sm:$0xff]
  %v1516 = vld [vmem:[%s7 + $0x88] sm:$0xff]
  %v1517 = vld [vmem:[%s7 + $0x90] sm:$0xff]
  %v1518 = vld [vmem:[%s7 + $0x98] sm:$0xff]
  %v1519 = vld [vmem:[%s7 + $0xa0] sm:$0xff]
  %v1520 = vld [vmem:[%s7 + $0xa8] sm:$0xff]
  %v1521 = vld [vmem:[%s7 + $0xb0] sm:$0xff]
  %v1522 = vld [vmem:[%s7 + $0xb8] sm:$0xff]
  %v1523 = vld [vmem:[%s7 + $0xc0] sm:$0xff]
  %v1524 = vld [vmem:[%s7 + $0xc8] sm:$0xff]
  %v1525 = vld [vmem:[%s7 + $0xd0] sm:$0xff]
  %v1526 = vld [vmem:[%s7 + $0xd8] sm:$0xff]
  %v1527 = vld [vmem:[%s7 + $0xe0] sm:$0xff]
  %v1528 = vld [vmem:[%s7 + $0xe8] sm:$0xff]
  %v1529 = vld [vmem:[%s7 + $0xf0] sm:$0xff]
  %v1530 = vld [vmem:[%s7 + $0xf8] sm:$0xff]
  %v1531 = vld [vmem:[%s7 + $0x100] sm:$0xff]
  %v1532 = vld [vmem:[%s7 + $0x108] sm:$0xff]
  %v1533 = vld [vmem:[%s7 + $0x110] sm:$0xff]
  %v1534 = vld [vmem:[%s7 + $0x118] sm:$0xff]
  %v1535 = vld [vmem:[%s7 + $0x120] sm:$0xff]
  %v1536 = vld [vmem:[%s7 + $0x128] sm:$0xff]
  %v1537 = vld [vmem:[%s7 + $0x130] sm:$0xff]
  %v1538 = vld [vmem:[%s7 + $0x138] sm:$0xff]
  %v1539 = vld [vmem:[%s7 + $0x140] sm:$0xff]
  %v1540 = vld [vmem:[%s7 + $0x148] sm:$0xff]
  %v1541 = vld [vmem:[%s7 + $0x150] sm:$0xff]
  %v1542 = vld [vmem:[%s7 + $0x158] sm:$0xff]
  %v1543 = vld [vmem:[%s7 + $0x160] sm:$0xff]
  %v1544 = vld [vmem:[%s7 + $0x168] sm:$0xff]
  %v1545 = vld [vmem:[%s7 + $0x170] sm:$0xff]
  %v1546 = vld [vmem:[%s7 + $0x178] sm:$0xff]
  %v1547 = vld [vmem:[%s7 + $0x180] sm:$0xff]
  %v1548 = vld [vmem:[%s7 + $0x188] sm:$0xff]
  %v1549 = vld [vmem:[%s7 + $0x190] sm:$0xff]
  %v1550 = vld [vmem:[%s7 + $0x198] sm:$0xff]
  %v1551 = vld [vmem:[%s7 + $0x1a0] sm:$0xff]
  %v1552 = vld [vmem:[%s7 + $0x1a8] sm:$0xff]
  %v1553 = vld [vmem:[%s7 + $0x1b0] sm:$0xff]
  %v1554 = vld [vmem:[%s7 + $0x1b8] sm:$0xff]
  %v1555 = vld [vmem:[%s7 + $0x1c0] sm:$0xff]
  %v1556 = vld [vmem:[%s7 + $0x1c8] sm:$0xff]
  %v1557 = vld [vmem:[%s7 + $0x1d0] sm:$0xff]
  %v1558 = vld [vmem:[%s7 + $0x1d8] sm:$0xff]
  %v1559 = vld [vmem:[%s7 + $0x1e0] sm:$0xff]
  %v1560 = vld [vmem:[%s7 + $0x1e8] sm:$0xff]
  %v1561 = vld [vmem:[%s7 + $0x1f0] sm:$0xff]
  %v1562 = vld [vmem:[%s7 + $0x1f8] sm:$0xff]
  %v1563 = vld [vmem:[%s8] sm:$0x3]
  %v1565 = vperm.slane %v1563, 0
  %v1566 = vperm.slane %v1563, 1
  %1569 = vmatpush.msra.mxu0 %v1529
  %1570 = vmatpush.msra.mxu0 %v1527
  %1571 = vmatpush.msra.mxu0 %v1525
  %1572 = vmatpush.msra.mxu0 %v1523
  %1573 = vmatpush.msra.mxu0 %v1521
  %1574 = vmatpush.msra.mxu0 %v1519
  %1575 = vmatpush.msra.mxu0 %v1517
  %1576 = vmatpush.msra.mxu0 %v1515
  %1577 = vmatpush.msra.mxu0 %v1513
  %1578 = vmatpush.msra.mxu0 %v1511
  %1579 = vmatpush.msra.mxu0 %v1509
  %1580 = vmatpush.msra.mxu0 %v1507
  %1581 = vmatpush.msra.mxu0 %v1505
  %1582 = vmatpush.msra.mxu0 %v1503
  %1583 = vmatpush.msra.mxu0 %v1501
  %1584 = vmatpush.msra.mxu0 %v1499
  %1585 = vmatmul.f32.gmra.mxu0 %v1467
  %v1586 = vpop.f32.mrf.mxu0
  %v1587 = vadd.f32 %v1565, %v1586
  %1588 = vmatmul.f32.gmra.mxu0 %v1471
  %v1589 = vpop.f32.mrf.mxu0
  %v1590 = vadd.f32 %v1565, %v1589
  %1591 = vmatmul.f32.gmra.mxu0 %v1475
  %v1592 = vpop.f32.mrf.mxu0
  %v1593 = vadd.f32 %v1565, %v1592
  %1594 = vmatmul.f32.gmra.mxu0 %v1479
  %v1595 = vpop.f32.mrf.mxu0
  %v1596 = vadd.f32 %v1565, %v1595
  %1597 = vmatmul.f32.gmra.mxu0 %v1469
  %v1598 = vpop.f32.mrf.mxu0
  %v1599 = vadd.f32 %v1565, %v1598
  %1600 = vmatmul.f32.gmra.mxu0 %v1473
  %v1601 = vpop.f32.mrf.mxu0
  %v1602 = vadd.f32 %v1565, %v1601
  %1603 = vmatmul.f32.gmra.mxu0 %v1477
  %v1604 = vpop.f32.mrf.mxu0
  %v1605 = vadd.f32 %v1565, %v1604
  %1606 = vmatmul.f32.gmra.mxu0 %v1481
  %v1607 = vpop.f32.mrf.mxu0
  %v1608 = vadd.f32 %v1565, %v1607
  %1609 = vdwg.mxu0
  %1610 = vmatpush.msra.mxu0 %v1561
  %1611 = vmatpush.msra.mxu0 %v1559
  %1612 = vmatpush.msra.mxu0 %v1557
  %1613 = vmatpush.msra.mxu0 %v1555
  %1614 = vmatpush.msra.mxu0 %v1553
  %1615 = vmatpush.msra.mxu0 %v1551
  %1616 = vmatpush.msra.mxu0 %v1549
  %1617 = vmatpush.msra.mxu0 %v1547
  %1618 = vmatpush.msra.mxu0 %v1545
  %1619 = vmatpush.msra.mxu0 %v1543
  %1620 = vmatpush.msra.mxu0 %v1541
  %1621 = vmatpush.msra.mxu0 %v1539
  %1622 = vmatpush.msra.mxu0 %v1537
  %1623 = vmatpush.msra.mxu0 %v1535
  %1624 = vmatpush.msra.mxu0 %v1533
  %1625 = vmatpush.msra.mxu0 %v1531
  %1626 = vmatmul.f32.gmra.mxu0 %v1468
  %v1627 = vpop.f32.mrf.mxu0
  %v1628 = vadd.f32 %v1587, %v1627
  %1629 = vmatmul.f32.gmra.mxu0 %v1472
  %v1630 = vpop.f32.mrf.mxu0
  %v1631 = vadd.f32 %v1590, %v1630
  %1632 = vmatmul.f32.gmra.mxu0 %v1476
  %v1633 = vpop.f32.mrf.mxu0
  %v1634 = vadd.f32 %v1593, %v1633
  %1635 = vmatmul.f32.gmra.mxu0 %v1480
  %v1636 = vpop.f32.mrf.mxu0
  %v1637 = vadd.f32 %v1596, %v1636
  %1638 = vmatmul.f32.gmra.mxu0 %v1470
  %v1639 = vpop.f32.mrf.mxu0
  %v1640 = vadd.f32 %v1599, %v1639
  %1641 = vmatmul.f32.gmra.mxu0 %v1474
  %v1642 = vpop.f32.mrf.mxu0
  %v1643 = vadd.f32 %v1602, %v1642
  %1644 = vmatmul.f32.gmra.mxu0 %v1478
  %v1645 = vpop.f32.mrf.mxu0
  %v1646 = vadd.f32 %v1605, %v1645
  %1647 = vmatmul.f32.gmra.mxu0 %v1482
  %v1648 = vpop.f32.mrf.mxu0
  %v1649 = vadd.f32 %v1608, %v1648
  %1650 = vdwg.mxu0
  %1651 = vmatpush.msra.mxu0 %v1530
  %1652 = vmatpush.msra.mxu0 %v1528
  %1653 = vmatpush.msra.mxu0 %v1526
  %1654 = vmatpush.msra.mxu0 %v1524
  %1655 = vmatpush.msra.mxu0 %v1522
  %1656 = vmatpush.msra.mxu0 %v1520
  %1657 = vmatpush.msra.mxu0 %v1518
  %1658 = vmatpush.msra.mxu0 %v1516
  %1659 = vmatpush.msra.mxu0 %v1514
  %1660 = vmatpush.msra.mxu0 %v1512
  %1661 = vmatpush.msra.mxu0 %v1510
  %1662 = vmatpush.msra.mxu0 %v1508
  %1663 = vmatpush.msra.mxu0 %v1506
  %1664 = vmatpush.msra.mxu0 %v1504
  %1665 = vmatpush.msra.mxu0 %v1502
  %1666 = vmatpush.msra.mxu0 %v1500
  %1667 = vmatmul.f32.gmra.mxu0 %v1467
  %v1668 = vpop.f32.mrf.mxu0
  %v1669 = vadd.f32 %v1566, %v1668
  %1670 = vmatmul.f32.gmra.mxu0 %v1471
  %v1671 = vpop.f32.mrf.mxu0
  %v1672 = vadd.f32 %v1566, %v1671
  %1673 = vmatmul.f32.gmra.mxu0 %v1475
  %v1674 = vpop.f32.mrf.mxu0
  %v1675 = vadd.f32 %v1566, %v1674
  %1676 = vmatmul.f32.gmra.mxu0 %v1479
  %v1677 = vpop.f32.mrf.mxu0
  %v1678 = vadd.f32 %v1566, %v1677
  %1679 = vmatmul.f32.gmra.mxu0 %v1469
  %v1680 = vpop.f32.mrf.mxu0
  %v1681 = vadd.f32 %v1566, %v1680
  %1682 = vmatmul.f32.gmra.mxu0 %v1473
  %v1683 = vpop.f32.mrf.mxu0
  %v1684 = vadd.f32 %v1566, %v1683
  %1685 = vmatmul.f32.gmra.mxu0 %v1477
  %v1686 = vpop.f32.mrf.mxu0
  %v1687 = vadd.f32 %v1566, %v1686
  %1688 = vmatmul.f32.gmra.mxu0 %v1481
  %v1689 = vpop.f32.mrf.mxu0
  %v1690 = vadd.f32 %v1566, %v1689
  %1691 = vdwg.mxu0
  %1692 = vmatpush.msra.mxu0 %v1562
  %1693 = vmatpush.msra.mxu0 %v1560
  %1694 = vmatpush.msra.mxu0 %v1558
  %1695 = vmatpush.msra.mxu0 %v1556
  %1696 = vmatpush.msra.mxu0 %v1554
  %1697 = vmatpush.msra.mxu0 %v1552
  %1698 = vmatpush.msra.mxu0 %v1550
  %1699 = vmatpush.msra.mxu0 %v1548
  %1700 = vmatpush.msra.mxu0 %v1546
  %1701 = vmatpush.msra.mxu0 %v1544
  %1702 = vmatpush.msra.mxu0 %v1542
  %1703 = vmatpush.msra.mxu0 %v1540
  %1704 = vmatpush.msra.mxu0 %v1538
  %1705 = vmatpush.msra.mxu0 %v1536
  %1706 = vmatpush.msra.mxu0 %v1534
  %1707 = vmatpush.msra.mxu0 %v1532
  %1708 = vmatmul.f32.gmra.mxu0 %v1468
  %v1709 = vpop.f32.mrf.mxu0
  %v1710 = vadd.f32 %v1669, %v1709
  %1711 = vmatmul.f32.gmra.mxu0 %v1472
  %v1712 = vpop.f32.mrf.mxu0
  %v1713 = vadd.f32 %v1672, %v1712
  %1714 = vmatmul.f32.gmra.mxu0 %v1476
  %v1715 = vpop.f32.mrf.mxu0
  %v1716 = vadd.f32 %v1675, %v1715
  %1717 = vmatmul.f32.gmra.mxu0 %v1480
  %v1718 = vpop.f32.mrf.mxu0
  %v1719 = vadd.f32 %v1678, %v1718
  %1720 = vmatmul.f32.gmra.mxu0 %v1470
  %v1721 = vpop.f32.mrf.mxu0
  %v1722 = vadd.f32 %v1681, %v1721
  %1723 = vmatmul.f32.gmra.mxu0 %v1474
  %v1724 = vpop.f32.mrf.mxu0
  %v1725 = vadd.f32 %v1684, %v1724
  %1726 = vmatmul.f32.gmra.mxu0 %v1478
  %v1727 = vpop.f32.mrf.mxu0
  %v1728 = vadd.f32 %v1687, %v1727
  %1729 = vmatmul.f32.gmra.mxu0 %v1482
  %v1730 = vpop.f32.mrf.mxu0
  %v1731 = vadd.f32 %v1690, %v1730
  %1732 = vdwg.mxu0
  %1734 = vset.pattern.permute.xlu0 0
  %1735 = vperm.xlu0 %1734, %v1483
  %v1736 = vpop.permute.xlu0 %1735
  %1739 = vset.pattern.permute.xlu0 0
  %1740 = vperm.xlu0 %1739, %v1484
  %v1741 = vpop.permute.xlu0 %1740
  %1744 = vset.pattern.permute.xlu0 0
  %1745 = vperm.xlu0 %1744, %v1485
  %v1746 = vpop.permute.xlu0 %1745
  %1749 = vset.pattern.permute.xlu0 0
  %1750 = vperm.xlu0 %1749, %v1486
  %v1751 = vpop.permute.xlu0 %1750
  %v1753 = vmul.f32 %v1628, %v1736
  %v1754 = vmul.f32 %v1710, %v1736
  %v1755 = vmul.f32 %v1631, %v1741
  %v1756 = vmul.f32 %v1713, %v1741
  %v1757 = vmul.f32 %v1634, %v1746
  %v1758 = vmul.f32 %v1716, %v1746
  %v1759 = vmul.f32 %v1637, %v1751
  %v1760 = vmul.f32 %v1719, %v1751
  %v1761 = vmul.f32 %v1640, %v1736
  %v1762 = vmul.f32 %v1722, %v1736
  %v1763 = vmul.f32 %v1643, %v1741
  %v1764 = vmul.f32 %v1725, %v1741
  %v1765 = vmul.f32 %v1646, %v1746
  %v1766 = vmul.f32 %v1728, %v1746
  %v1767 = vmul.f32 %v1649, %v1751
  %v1768 = vmul.f32 %v1731, %v1751
  %1770 = vset.pattern.permute.xlu0 0
  %1771 = vperm.xlu0 %1770, %v1487
  %v1772 = vpop.permute.xlu0 %1771
  %1775 = vset.pattern.permute.xlu0 0
  %1776 = vperm.xlu0 %1775, %v1488
  %v1777 = vpop.permute.xlu0 %1776
  %1780 = vset.pattern.permute.xlu0 0
  %1781 = vperm.xlu0 %1780, %v1489
  %v1782 = vpop.permute.xlu0 %1781
  %1785 = vset.pattern.permute.xlu0 0
  %1786 = vperm.xlu0 %1785, %v1490
  %v1787 = vpop.permute.xlu0 %1786
  %v1789 = vadd.f32 %v1753, %v1772
  %v1790 = vadd.f32 %v1754, %v1772
  %v1791 = vadd.f32 %v1755, %v1777
  %v1792 = vadd.f32 %v1756, %v1777
  %v1793 = vadd.f32 %v1757, %v1782
  %v1794 = vadd.f32 %v1758, %v1782
  %v1795 = vadd.f32 %v1759, %v1787
  %v1796 = vadd.f32 %v1760, %v1787
  %v1797 = vadd.f32 %v1761, %v1772
  %v1798 = vadd.f32 %v1762, %v1772
  %v1799 = vadd.f32 %v1763, %v1777
  %v1800 = vadd.f32 %v1764, %v1777
  %v1801 = vadd.f32 %v1765, %v1782
  %v1802 = vadd.f32 %v1766, %v1782
  %v1803 = vadd.f32 %v1767, %v1787
  %v1804 = vadd.f32 %v1768, %v1787
  %v1805 = vmax.f32 %v1789, 0.0
  %v1806 = vmax.f32 %v1790, 0.0
  %v1807 = vmax.f32 %v1791, 0.0
  %v1808 = vmax.f32 %v1792, 0.0
  %v1809 = vmax.f32 %v1793, 0.0
  %v1810 = vmax.f32 %v1794, 0.0
  %v1811 = vmax.f32 %v1795, 0.0
  %v1812 = vmax.f32 %v1796, 0.0
  %v1813 = vmax.f32 %v1797, 0.0
  %v1814 = vmax.f32 %v1798, 0.0
  %v1815 = vmax.f32 %v1799, 0.0
  %v1816 = vmax.f32 %v1800, 0.0
  %v1817 = vmax.f32 %v1801, 0.0
  %v1818 = vmax.f32 %v1802, 0.0
  %v1819 = vmax.f32 %v1803, 0.0
  %v1820 = vmax.f32 %v1804, 0.0
  %v1821 = vld [vmem:[%s11] sm:$0xff]
  %v1822 = vld [vmem:[%s11 + $0x8] sm:$0xff]
  %v1823 = vld [vmem:[%s11 + $0x10] sm:$0xff]
  %v1824 = vld [vmem:[%s11 + $0x18] sm:$0xff]
  %v1825 = vld [vmem:[%s11 + $0x20] sm:$0xff]
  %v1826 = vld [vmem:[%s11 + $0x28] sm:$0xff]
  %v1827 = vld [vmem:[%s11 + $0x30] sm:$0xff]
  %v1828 = vld [vmem:[%s11 + $0x38] sm:$0xff]
  %v1829 = vld [vmem:[%s11 + $0x40] sm:$0xff]
  %v1830 = vld [vmem:[%s11 + $0x48] sm:$0xff]
  %v1831 = vld [vmem:[%s11 + $0x50] sm:$0xff]
  %v1832 = vld [vmem:[%s11 + $0x58] sm:$0xff]
  %v1833 = vld [vmem:[%s11 + $0x60] sm:$0xff]
  %v1834 = vld [vmem:[%s11 + $0x68] sm:$0xff]
  %v1835 = vld [vmem:[%s11 + $0x70] sm:$0xff]
  %v1836 = vld [vmem:[%s11 + $0x78] sm:$0xff]
  %v1837 = vld [vmem:[%s11 + $0x80] sm:$0xff]
  %v1838 = vld [vmem:[%s11 + $0x88] sm:$0xff]
  %v1839 = vld [vmem:[%s11 + $0x90] sm:$0xff]
  %v1840 = vld [vmem:[%s11 + $0x98] sm:$0xff]
  %v1841 = vld [vmem:[%s11 + $0xa0] sm:$0xff]
  %v1842 = vld [vmem:[%s11 + $0xa8] sm:$0xff]
  %v1843 = vld [vmem:[%s11 + $0xb0] sm:$0xff]
  %v1844 = vld [vmem:[%s11 + $0xb8] sm:$0xff]
  %v1845 = vld [vmem:[%s11 + $0xc0] sm:$0xff]
  %v1846 = vld [vmem:[%s11 + $0xc8] sm:$0xff]
  %v1847 = vld [vmem:[%s11 + $0xd0] sm:$0xff]
  %v1848 = vld [vmem:[%s11 + $0xd8] sm:$0xff]
  %v1849 = vld [vmem:[%s11 + $0xe0] sm:$0xff]
  %v1850 = vld [vmem:[%s11 + $0xe8] sm:$0xff]
  %v1851 = vld [vmem:[%s11 + $0xf0] sm:$0xff]
  %v1852 = vld [vmem:[%s11 + $0xf8] sm:$0xff]
  %v1853 = vld [vmem:[%s12] sm:$0x1]
  %v1855 = vperm.slane %v1853, 0
  %1857 = vmatpush.msra.mxu0 %v1836
  %1858 = vmatpush.msra.mxu0 %v1835
  %1859 = vmatpush.msra.mxu0 %v1834
  %1860 = vmatpush.msra.mxu0 %v1833
  %1861 = vmatpush.msra.mxu0 %v1832
  %1862 = vmatpush.msra.mxu0 %v1831
  %1863 = vmatpush.msra.mxu0 %v1830
  %1864 = vmatpush.msra.mxu0 %v1829
  %1865 = vmatpush.msra.mxu0 %v1828
  %1866 = vmatpush.msra.mxu0 %v1827
  %1867 = vmatpush.msra.mxu0 %v1826
  %1868 = vmatpush.msra.mxu0 %v1825
  %1869 = vmatpush.msra.mxu0 %v1824
  %1870 = vmatpush.msra.mxu0 %v1823
  %1871 = vmatpush.msra.mxu0 %v1822
  %1872 = vmatpush.msra.mxu0 %v1821
  %1873 = vmatmul.f32.gmra.mxu0 %v1805
  %v1874 = vpop.f32.mrf.mxu0
  %v1875 = vadd.f32 %v1855, %v1874
  %1876 = vmatmul.f32.gmra.mxu0 %v1807
  %v1877 = vpop.f32.mrf.mxu0
  %v1878 = vadd.f32 %v1855, %v1877
  %1879 = vmatmul.f32.gmra.mxu0 %v1809
  %v1880 = vpop.f32.mrf.mxu0
  %v1881 = vadd.f32 %v1855, %v1880
  %1882 = vmatmul.f32.gmra.mxu0 %v1811
  %v1883 = vpop.f32.mrf.mxu0
  %v1884 = vadd.f32 %v1855, %v1883
  %1885 = vmatmul.f32.gmra.mxu0 %v1813
  %v1886 = vpop.f32.mrf.mxu0
  %v1887 = vadd.f32 %v1855, %v1886
  %1888 = vmatmul.f32.gmra.mxu0 %v1815
  %v1889 = vpop.f32.mrf.mxu0
  %v1890 = vadd.f32 %v1855, %v1889
  %1891 = vmatmul.f32.gmra.mxu0 %v1817
  %v1892 = vpop.f32.mrf.mxu0
  %v1893 = vadd.f32 %v1855, %v1892
  %1894 = vmatmul.f32.gmra.mxu0 %v1819
  %v1895 = vpop.f32.mrf.mxu0
  %v1896 = vadd.f32 %v1855, %v1895
  %1897 = vdwg.mxu0
  %1898 = vmatpush.msra.mxu0 %v1852
  %1899 = vmatpush.msra.mxu0 %v1851
  %1900 = vmatpush.msra.mxu0 %v1850
  %1901 = vmatpush.msra.mxu0 %v1849
  %1902 = vmatpush.msra.mxu0 %v1848
  %1903 = vmatpush.msra.mxu0 %v1847
  %1904 = vmatpush.msra.mxu0 %v1846
  %1905 = vmatpush.msra.mxu0 %v1845
  %1906 = vmatpush.msra.mxu0 %v1844
  %1907 = vmatpush.msra.mxu0 %v1843
  %1908 = vmatpush.msra.mxu0 %v1842
  %1909 = vmatpush.msra.mxu0 %v1841
  %1910 = vmatpush.msra.mxu0 %v1840
  %1911 = vmatpush.msra.mxu0 %v1839
  %1912 = vmatpush.msra.mxu0 %v1838
  %1913 = vmatpush.msra.mxu0 %v1837
  %1914 = vmatmul.f32.gmra.mxu0 %v1806
  %v1915 = vpop.f32.mrf.mxu0
  %v1916 = vadd.f32 %v1875, %v1915
  %1917 = vmatmul.f32.gmra.mxu0 %v1808
  %v1918 = vpop.f32.mrf.mxu0
  %v1919 = vadd.f32 %v1878, %v1918
  %1920 = vmatmul.f32.gmra.mxu0 %v1810
  %v1921 = vpop.f32.mrf.mxu0
  %v1922 = vadd.f32 %v1881, %v1921
  %1923 = vmatmul.f32.gmra.mxu0 %v1812
  %v1924 = vpop.f32.mrf.mxu0
  %v1925 = vadd.f32 %v1884, %v1924
  %1926 = vmatmul.f32.gmra.mxu0 %v1814
  %v1927 = vpop.f32.mrf.mxu0
  %v1928 = vadd.f32 %v1887, %v1927
  %1929 = vmatmul.f32.gmra.mxu0 %v1816
  %v1930 = vpop.f32.mrf.mxu0
  %v1931 = vadd.f32 %v1890, %v1930
  %1932 = vmatmul.f32.gmra.mxu0 %v1818
  %v1933 = vpop.f32.mrf.mxu0
  %v1934 = vadd.f32 %v1893, %v1933
  %1935 = vmatmul.f32.gmra.mxu0 %v1820
  %v1936 = vpop.f32.mrf.mxu0
  %v1937 = vadd.f32 %v1896, %v1936
  %1938 = vdwg.mxu0
  %1940 = vset.pattern.permute.xlu0 0
  %1941 = vperm.xlu0 %1940, %v1491
  %v1942 = vpop.permute.xlu0 %1941
  %1945 = vset.pattern.permute.xlu0 0
  %1946 = vperm.xlu0 %1945, %v1492
  %v1947 = vpop.permute.xlu0 %1946
  %1950 = vset.pattern.permute.xlu0 0
  %1951 = vperm.xlu0 %1950, %v1493
  %v1952 = vpop.permute.xlu0 %1951
  %1955 = vset.pattern.permute.xlu0 0
  %1956 = vperm.xlu0 %1955, %v1494
  %v1957 = vpop.permute.xlu0 %1956
  %v1959 = vmul.f32 %v1916, %v1942
  %v1960 = vmul.f32 %v1919, %v1947
  %v1961 = vmul.f32 %v1922, %v1952
  %v1962 = vmul.f32 %v1925, %v1957
  %v1963 = vmul.f32 %v1928, %v1942
  %v1964 = vmul.f32 %v1931, %v1947
  %v1965 = vmul.f32 %v1934, %v1952
  %v1966 = vmul.f32 %v1937, %v1957
  %1968 = vset.pattern.permute.xlu0 0
  %1969 = vperm.xlu0 %1968, %v1495
  %v1970 = vpop.permute.xlu0 %1969
  %1973 = vset.pattern.permute.xlu0 0
  %1974 = vperm.xlu0 %1973, %v1496
  %v1975 = vpop.permute.xlu0 %1974
  %1978 = vset.pattern.permute.xlu0 0
  %1979 = vperm.xlu0 %1978, %v1497
  %v1980 = vpop.permute.xlu0 %1979
  %1983 = vset.pattern.permute.xlu0 0
  %1984 = vperm.xlu0 %1983, %v1498
  %v1985 = vpop.permute.xlu0 %1984
  %v1987 = vadd.f32 %v1959, %v1970
  %v1988 = vadd.f32 %v1960, %v1975
  %v1989 = vadd.f32 %v1961, %v1980
  %v1990 = vadd.f32 %v1962, %v1985
  %v1991 = vadd.f32 %v1963, %v1970
  %v1992 = vadd.f32 %v1964, %v1975
  %v1993 = vadd.f32 %v1965, %v1980
  %v1994 = vadd.f32 %v1966, %v1985
  %v1995 = vmax.f32 %v1987, 0.0
  %v1996 = vmax.f32 %v1988, 0.0
  %v1997 = vmax.f32 %v1989, 0.0
  %v1998 = vmax.f32 %v1990, 0.0
  %v1999 = vmax.f32 %v1991, 0.0
  %v2000 = vmax.f32 %v1992, 0.0
  %v2001 = vmax.f32 %v1993, 0.0
  %v2002 = vmax.f32 %v1994, 0.0
  %v2003 = vld [vmem:[%s15] sm:$0xff]
  %v2004 = vld [vmem:[%s15 + $0x8] sm:$0xff]
  %v2005 = vld [vmem:[%s15 + $0x10] sm:$0xff]
  %v2006 = vld [vmem:[%s15 + $0x18] sm:$0xff]
  %v2007 = vld [vmem:[%s15 + $0x20] sm:$0xff]
  %v2008 = vld [vmem:[%s15 + $0x28] sm:$0xff]
  %v2009 = vld [vmem:[%s15 + $0x30] sm:$0xff]
  %v2010 = vld [vmem:[%s15 + $0x38] sm:$0xff]
  %v2011 = vld [vmem:[%s15 + $0x40] sm:$0xff]
  %v2012 = vld [vmem:[%s15 + $0x48] sm:$0xff]
  %v2013 = vld [vmem:[%s15 + $0x50] sm:$0xff]
  %v2014 = vld [vmem:[%s15 + $0x58] sm:$0xff]
  %v2015 = vld [vmem:[%s15 + $0x60] sm:$0xff]
  %v2016 = vld [vmem:[%s15 + $0x68] sm:$0xff]
  %v2017 = vld [vmem:[%s15 + $0x70] sm:$0xff]
  %v2018 = vld [vmem:[%s15 + $0x78] sm:$0xff]
  %v2019 = vld [vmem:[%s16] sm:$0x1]
  %v2021 = vperm.slane %v2019, 0
  %2023 = vmatpush.msra.mxu0 %v2018
  %2024 = vmatpush.msra.mxu0 %v2017
  %2025 = vmatpush.msra.mxu0 %v2016
  %2026 = vmatpush.msra.mxu0 %v2015
  %2027 = vmatpush.msra.mxu0 %v2014
  %2028 = vmatpush.msra.mxu0 %v2013
  %2029 = vmatpush.msra.mxu0 %v2012
  %2030 = vmatpush.msra.mxu0 %v2011
  %2031 = vmatpush.msra.mxu0 %v2010
  %2032 = vmatpush.msra.mxu0 %v2009
  %2033 = vmatpush.msra.mxu0 %v2008
  %2034 = vmatpush.msra.mxu0 %v2007
  %2035 = vmatpush.msra.mxu0 %v2006
  %2036 = vmatpush.msra.mxu0 %v2005
  %2037 = vmatpush.msra.mxu0 %v2004
  %2038 = vmatpush.msra.mxu0 %v2003
  %2039 = vmatmul.f32.gmra.mxu0 %v1995
  %v2040 = vpop.f32.mrf.mxu0
  %v2041 = vadd.f32 %v2021, %v2040
  %2042 = vmatmul.f32.gmra.mxu0 %v1996
  %v2043 = vpop.f32.mrf.mxu0
  %v2044 = vadd.f32 %v2021, %v2043
  %2045 = vmatmul.f32.gmra.mxu0 %v1997
  %v2046 = vpop.f32.mrf.mxu0
  %v2047 = vadd.f32 %v2021, %v2046
  %2048 = vmatmul.f32.gmra.mxu0 %v1998
  %v2049 = vpop.f32.mrf.mxu0
  %v2050 = vadd.f32 %v2021, %v2049
  %2051 = vmatmul.f32.gmra.mxu0 %v1999
  %v2052 = vpop.f32.mrf.mxu0
  %v2053 = vadd.f32 %v2021, %v2052
  %2054 = vmatmul.f32.gmra.mxu0 %v2000
  %v2055 = vpop.f32.mrf.mxu0
  %v2056 = vadd.f32 %v2021, %v2055
  %2057 = vmatmul.f32.gmra.mxu0 %v2001
  %v2058 = vpop.f32.mrf.mxu0
  %v2059 = vadd.f32 %v2021, %v2058
  %2060 = vmatmul.f32.gmra.mxu0 %v2002
  %v2061 = vpop.f32.mrf.mxu0
  %v2062 = vadd.f32 %v2021, %v2061
  %2063 = vdwg.mxu0
  %2064 = vst [vmem:[%s17] sm:$0xff] %v2041
  %2065 = vst [vmem:[%s17 + $0x8] sm:$0xff] %v2044
  %2066 = vst [vmem:[%s17 + $0x10] sm:$0xff] %v2047
  %2067 = vst [vmem:[%s17 + $0x18] sm:$0xff] %v2050
  %2068 = vst [vmem:[%s17 + $0x20] sm:$0xff] %v2053
  %2069 = vst [vmem:[%s17 + $0x28] sm:$0xff] %v2056
  %2070 = vst [vmem:[%s17 + $0x30] sm:$0xff] %v2059
  %2071 = vst [vmem:[%s17 + $0x38] sm:$0xff] %v2062
  // Predicated region
  $region70: #{one_d_cnn_forward.2} parent=0 // pred_check
    _
  $region71: #{one_d_cnn_forward.2} parent=0 // pred_check_branch
    %2073 = sbr.rel (0) target = $region73
  $region72: #{one_d_cnn_forward.2} parent=0 // pred_region
    _
  $region73: #{one_d_cnn_forward.2} parent=0 // pred_fallthru
    _
  // Predicated region
  $region74: #{one_d_cnn_forward.2} parent=0 // pred_check
    _
  $region75: #{one_d_cnn_forward.2} parent=0 // pred_check_branch
    %2075 = sbr.rel (0) target = $region77
  $region76: #{one_d_cnn_forward.2} parent=0 // pred_region
    _
  $region77: #{one_d_cnn_forward.2} parent=0 // pred_fallthru
    _

</llo_original>
